<compile_context>
chip_gen: v7x
topology: tpu7x:2x2x1
jax: 0.10.0
libtpu: 0.0.40
codegen_flags: <defaults>
</compile_context>

<pallas_src>
import jax
import jax.numpy as jnp
from jax import lax
from jax.experimental import pallas as pl
from jax.experimental.pallas import tpu as pltpu

D_HID_PAD = 128          # hidden 10 -> 128 (lives only in vregs/VMEM, never HBM)
TM_MAX = 1024            # max batch-tile rows; 1024*10*f32 = 40 KiB per buffer
FAST_PATH_MIN_ROWS = 64  # below this, skip pallas_call (launch overhead dominates)


def _round_up(n, m):
    return ((n + m - 1) // m) * m


def _cdiv(a, b):
    return (a + b - 1) // b


def block_kernel(x_ref, w1_ref, b1_ref, w2_ref, b2_ref, o_ref):
    # x_ref:  (TM, 10)   unpadded batch tile (lane dim == full array extent)
    # w1_ref: (10, 128)  Linear1 weight [in, out_pad]; padded out-cols are zero
    # b1_ref: (1, 128)   Linear1 bias; padded lanes are zero
    # w2_ref: (128, 10)  Linear2 weight [in_pad, out]; padded in-rows are zero
    # b2_ref: (1, 10)    Linear2 bias
    # o_ref:  (TM, 10)
    x = x_ref[...]
    # subblock1: Linear(10, 10)  (f32 accumulate on the MXU)
    h = jnp.dot(x, w1_ref[...],
                preferred_element_type=jnp.float32,
                precision=lax.Precision.HIGHEST) + b1_ref[...]
    # activation: ReLU  (padded hidden lanes stay exactly 0: 0*w + 0 bias -> 0)
    h = jnp.maximum(h, 0.0)
    # subblock2: Linear(10, 10)
    y = jnp.dot(h, w2_ref[...],
                preferred_element_type=jnp.float32,
                precision=lax.Precision.HIGHEST) + b2_ref[...]
    o_ref[...] = y.astype(o_ref.dtype)


def prepare_block_params(w1, b1, w2, b2, d_hid_pad=D_HID_PAD):
    """One-time preprocessing (call OUTSIDE the per-step hot path).

    Takes PyTorch-layout weights [out, in] and biases [out]; returns
      w1_p: (d_in, d_hid_pad)   transposed, out(hidden) dim zero-padded
      b1_p: (1, d_hid_pad)      zero-padded lanes
      w2_p: (d_hid_pad, d_out)  transposed, in(hidden) dim zero-padded
      b2_p: (1, d_out)
    Padded lanes/rows are zero so no garbage leaks into the real output.
    """
    w1 = jnp.asarray(w1, jnp.float32)
    b1 = jnp.asarray(b1, jnp.float32)
    w2 = jnp.asarray(w2, jnp.float32)
    b2 = jnp.asarray(b2, jnp.float32)
    d_hid, d_in = w1.shape          # torch layout [out, in]
    d_out = w2.shape[0]
    w1_p = jnp.zeros((d_in, d_hid_pad), jnp.float32).at[:, :d_hid].set(w1.T)
    b1_p = jnp.zeros((1, d_hid_pad), jnp.float32).at[0, :d_hid].set(b1)
    w2_p = jnp.zeros((d_hid_pad, d_out), jnp.float32).at[:d_hid, :].set(w2.T)
    b2_p = b2.reshape(1, d_out)
    return w1_p, b1_p, w2_p, b2_p


def _choose_batch_tile(B):
    if B <= 16:
        return _round_up(max(B, 1), 8)
    # At least 2 tiles when there is enough work, so ("parallel",) can shard
    # the batch across v7x's 2 TensorCores; capped at TM_MAX rows.
    return min(TM_MAX, _round_up(_cdiv(B, 2), 8))


def block_forward(x, params, *, force_pallas=False):
    """x: [B, 10] f32; params: output of prepare_block_params."""
    w1_p, b1_p, w2_p, b2_p = params
    B, d_in = x.shape
    d_hid_pad = w1_p.shape[1]
    d_out = w2_p.shape[1]

    if not force_pallas and B < FAST_PATH_MIN_ROWS:
        # Small-batch fast path: a plain XLA fusion avoids kernel-launch and
        # DMA-setup overhead and is numerically identical.
        h = jnp.maximum(
            jnp.dot(x, w1_p, preferred_element_type=jnp.float32,
                    precision=lax.Precision.HIGHEST) + b1_p, 0.0)
        y = jnp.dot(h, w2_p, preferred_element_type=jnp.float32,
                    precision=lax.Precision.HIGHEST) + b2_p
        return y.astype(x.dtype)

    tm = _choose_batch_tile(B)
    grid = (_cdiv(B, tm),)   # ragged last tile handled by Pallas; no batch padding

    # NOTE: default double-buffering is enough here (per-step DMA is tiny);
    # pipeline_mode=pl.Buffered(3) on the x/out specs is an option if profiling
    # still shows exposed DMA issue latency.
    return pl.pallas_call(
        block_kernel,
        out_shape=jax.ShapeDtypeStruct((B, d_out), x.dtype),
        grid=grid,
        in_specs=[
            # x: streamed unpadded, tiled along batch -> pipelined by Pallas.
            pl.BlockSpec((tm, d_in), lambda i: (i, 0)),
            # Weights + biases: constant block index -> VMEM-resident.
            pl.BlockSpec((d_in, d_hid_pad), lambda i: (0, 0)),
            pl.BlockSpec((1, d_hid_pad), lambda i: (0, 0)),
            pl.BlockSpec((d_hid_pad, d_out), lambda i: (0, 0)),
            pl.BlockSpec((1, d_out), lambda i: (0, 0)),
        ],
        out_specs=pl.BlockSpec((tm, d_out), lambda i: (i, 0)),
        compiler_params=pltpu.CompilerParams(
            # Independent batch tiles: shard across the 2 TCs on v7x.
            dimension_semantics=("parallel",),
        ),
    )(x, w1_p, b1_p, w2_p, b2_p)


def _init_linear(key, out_features, in_features):
    # Deterministic init mimicking torch.nn.Linear's uniform(-1/sqrt(in), 1/sqrt(in)).
    kw, kb = jax.random.split(key)
    bound = 1.0 / (in_features ** 0.5)
    w = jax.random.uniform(kw, (out_features, in_features),
                           minval=-bound, maxval=bound, dtype=jnp.float32)
    b = jax.random.uniform(kb, (out_features,),
                           minval=-bound, maxval=bound, dtype=jnp.float32)
    return w, b


if __name__ == "__main__":
    key = jax.random.PRNGKey(0)
    kx, k1, k2 = jax.random.split(key, 3)

    B, D = 200, 10  # modest batch (exercises 2 grid tiles + a ragged last tile)
    x = jax.random.normal(kx, (B, D), dtype=jnp.float32)
    w1, b1 = _init_linear(k1, D, D)
    w2, b2 = _init_linear(k2, D, D)

    # One-time parameter prep (transpose + hidden-dim pad), hoisted out of the hot path.
    params = prepare_block_params(w1, b1, w2, b2)
    params = jax.block_until_ready(params)

    # Pallas kernel path (forced so the kernel definitely runs once).
    y = block_forward(x, params, force_pallas=True)
    y = jax.block_until_ready(y)

    # Pure-JAX reference (PyTorch semantics: x @ W.T + b), true-f32 matmuls.
    h_ref = jnp.maximum(jnp.dot(x, w1.T, precision=lax.Precision.HIGHEST) + b1, 0.0)
    ref = jnp.dot(h_ref, w2.T, precision=lax.Precision.HIGHEST) + b2

    assert y.shape == (B, D), f"bad output shape {y.shape}"
    assert jnp.allclose(y, ref, atol=1e-5, rtol=1e-5), "pallas mismatch vs reference"

    # Small-batch fast path sanity check (takes the non-pallas branch).
    y_small = jax.block_until_ready(block_forward(x[:8], params))
    assert jnp.allclose(y_small, ref[:8], atol=1e-5, rtol=1e-5), "fast-path mismatch"

    print("KERNEL_OK")
</pallas_src>

<mosaic_0001>
module attributes {stable_mosaic.version = 11 : i64} {
  func.func @block_kernel(%arg0: i32, %arg1: memref<104x10xf32, #tpu.memory_space<vmem>>, %arg2: memref<10x128xf32, #tpu.memory_space<vmem>>, %arg3: memref<1x128xf32, #tpu.memory_space<vmem>>, %arg4: memref<128x10xf32, #tpu.memory_space<vmem>>, %arg5: memref<1x10xf32, #tpu.memory_space<vmem>>, %arg6: memref<104x10xf32, #tpu.memory_space<vmem>>) attributes {dimension_semantics = [#tpu.dimension_semantics<parallel>], iteration_bounds = array<i64: 2>, scalar_prefetch = 0 : i64, scratch_operands = 0 : i64, tpu.core_type = #tpu.core_type<tc>, window_params = [{transform_indices = @transform_0, window_bounds = array<i64: 104, 10>}, {pipeline_mode = #tpu.pipeline_mode<synchronous>, transform_indices = @transform_1, window_bounds = array<i64: 10, 128>}, {pipeline_mode = #tpu.pipeline_mode<synchronous>, transform_indices = @transform_2, window_bounds = array<i64: 1, 128>}, {pipeline_mode = #tpu.pipeline_mode<synchronous>, transform_indices = @transform_3, window_bounds = array<i64: 128, 10>}, {pipeline_mode = #tpu.pipeline_mode<synchronous>, transform_indices = @transform_4, window_bounds = array<i64: 1, 10>}, {transform_indices = @transform_5, window_bounds = array<i64: 104, 10>}]} {
    %c0 = arith.constant 0 : index
    %c0_0 = arith.constant 0 : index
    %0 = vector.load %arg1[%c0, %c0_0] : memref<104x10xf32, #tpu.memory_space<vmem>>, vector<104x10xf32>
    %c0_1 = arith.constant 0 : index
    %c0_2 = arith.constant 0 : index
    %1 = vector.load %arg2[%c0_1, %c0_2] : memref<10x128xf32, #tpu.memory_space<vmem>>, vector<10x128xf32>
    %cst = arith.constant dense<0.000000e+00> : vector<104x128xf32>
    %2 = tpu.matmul %0, %1, %cst {dimension_numbers = #tpu.dot_dimension_numbers<[1], [0], [0], [1], [0, 0, 1, 1], [], []>, precision = #tpu.contract_precision<fp32>} : vector<104x10xf32>, vector<10x128xf32>, vector<104x128xf32> -> vector<104x128xf32>
    %c0_3 = arith.constant 0 : index
    %c0_4 = arith.constant 0 : index
    %3 = vector.load %arg3[%c0_3, %c0_4] : memref<1x128xf32, #tpu.memory_space<vmem>>, vector<1x128xf32>
    %4 = vector.broadcast %3 : vector<1x128xf32> to vector<104x128xf32>
    %5 = arith.addf %2, %4 : vector<104x128xf32>
    %cst_5 = arith.constant 0.000000e+00 : f32
    %6 = vector.broadcast %cst_5 : f32 to vector<104x128xf32>
    %7 = arith.maximumf %5, %6 : vector<104x128xf32>
    %c0_6 = arith.constant 0 : index
    %c0_7 = arith.constant 0 : index
    %8 = vector.load %arg4[%c0_6, %c0_7] : memref<128x10xf32, #tpu.memory_space<vmem>>, vector<128x10xf32>
    %cst_8 = arith.constant dense<0.000000e+00> : vector<104x10xf32>
    %9 = tpu.matmul %7, %8, %cst_8 {dimension_numbers = #tpu.dot_dimension_numbers<[1], [0], [0], [1], [0, 0, 1, 1], [], []>, precision = #tpu.contract_precision<fp32>} : vector<104x128xf32>, vector<128x10xf32>, vector<104x10xf32> -> vector<104x10xf32>
    %c0_9 = arith.constant 0 : index
    %c0_10 = arith.constant 0 : index
    %10 = vector.load %arg5[%c0_9, %c0_10] : memref<1x10xf32, #tpu.memory_space<vmem>>, vector<1x10xf32>
    %11 = vector.broadcast %10 : vector<1x10xf32> to vector<104x10xf32>
    %12 = arith.addf %9, %11 : vector<104x10xf32>
    %c0_11 = arith.constant 0 : index
    %c0_12 = arith.constant 0 : index
    %13 = vector.load %arg6[%c0_11, %c0_12] : memref<104x10xf32, #tpu.memory_space<vmem>>, vector<104x10xf32>
    tpu.vector_store %arg6[%c0_11, %c0_12], %12 {strides = array<i32>} : memref<104x10xf32, #tpu.memory_space<vmem>>, vector<104x10xf32>,
    return
  }
  func.func @transform_0(%arg0: i32) -> (i32, i32) {
    %c0_i32 = arith.constant 0 : i32
    %c0_i32_0 = arith.constant 0 : i32
    return %arg0, %c0_i32 : i32, i32
  }
  func.func @transform_1(%arg0: i32) -> (i32, i32) {
    %c0_i32 = arith.constant 0 : i32
    %c0_i32_0 = arith.constant 0 : i32
    %c0_i32_1 = arith.constant 0 : i32
    return %c0_i32, %c0_i32_0 : i32, i32
  }
  func.func @transform_2(%arg0: i32) -> (i32, i32) {
    %c0_i32 = arith.constant 0 : i32
    %c0_i32_0 = arith.constant 0 : i32
    %c0_i32_1 = arith.constant 0 : i32
    return %c0_i32, %c0_i32_0 : i32, i32
  }
  func.func @transform_3(%arg0: i32) -> (i32, i32) {
    %c0_i32 = arith.constant 0 : i32
    %c0_i32_0 = arith.constant 0 : i32
    %c0_i32_1 = arith.constant 0 : i32
    return %c0_i32, %c0_i32_0 : i32, i32
  }
  func.func @transform_4(%arg0: i32) -> (i32, i32) {
    %c0_i32 = arith.constant 0 : i32
    %c0_i32_0 = arith.constant 0 : i32
    %c0_i32_1 = arith.constant 0 : i32
    return %c0_i32, %c0_i32_0 : i32, i32
  }
  func.func @transform_5(%arg0: i32) -> (i32, i32) {
    %c0_i32 = arith.constant 0 : i32
    %c0_i32_0 = arith.constant 0 : i32
    return %arg0, %c0_i32 : i32, i32
  }
}

</mosaic_0001>

<llo_original>
// kernel: tpu_custom_call.1
$region0: #{tpu_custom_call.1}
  #allocation0 [shape = 'u32[]', space=smem, size = 0x4, offset = 0x4, fixed_abs, tag = 'smem constant byte address 0x4 - core index']
  #allocation1 [shape = 'u32[144,128]{1,0:T(1,128)}', space=vmem, size = 0x12000, scoped, tag = 'internal scratch']
  %s0 = inlined_call_operand.vmem [shape: f32[200,10], index: 0, kind: input, shape index: {}]
  %s1 = inlined_call_operand.vmem [shape: f32[10,128], index: 1, kind: input, shape index: {}]
  %s2 = inlined_call_operand.vmem [shape: f32[1,128], index: 2, kind: input, shape index: {}]
  %s3 = inlined_call_operand.vmem [shape: f32[128,10], index: 3, kind: input, shape index: {}]
  %s4 = inlined_call_operand.vmem [shape: f32[1,10], index: 4, kind: input, shape index: {}]
  %s5 = inlined_call_operand.vmem [shape: f32[200,10], index: 5, kind: output, shape index: {}]
  %s6 = sld [smem:[#allocation0]]
  $region101: #{tpu_custom_call.1} parent=0
    _
  %s8 = ssub.s32 1, %s6
  %s9 = scalar_select 0, %s8, %s6
  $region1: #{tpu_custom_call.1} parent=0
    #allocation2 [shape = 'u8[106496]{0}', space=vmem, size = 0x1a000, scoped, tag = 'output window, operand 0']
    loop: start=0, step=1, limit=4
    $region2: #{tpu_custom_call.1} parent=1 // loop_pre_header
      _
    $region3: #{tpu_custom_call.1} parent=1 // loop_header
      %s11 = sphi 0, %s15
      %p12 = scmp.ge.s32.totalorder %s11, 4
      %s21 = sphi 0, %s23
      %s24 = sphi 0, %s21
      %s25 = sphi 0, %s24
      %s41 = sphi 0, %s25
      %s45 = sphi 0, %s45
      %s47 = sphi 0, %s45
      %s48 = sphi 0, %s47
      %s62 = sphi 0, %s48
      %s66 = sphi 0, %s66
      %s68 = sphi 0, %s66
      %s69 = sphi 0, %s68
      %s83 = sphi 0, %s69
      %s87 = sphi 0, %s87
      %s89 = sphi 0, %s87
      %s90 = sphi 0, %s89
      %s104 = sphi 0, %s90
      %s108 = sphi 0, %s108
      %s110 = sphi 0, %s108
      %s111 = sphi 0, %s110
      %s125 = sphi 0, %s111
      %s131 = sphi 0, %s133
      %s134 = sphi 0, %s131
      %s135 = sphi 0, %s134
      %s151 = sphi 0, %s135
    $region4: #{tpu_custom_call.1} parent=1 // loop_header_branch
      %14 = sbr.rel (%p12) target = $region8
    $region5: #{tpu_custom_call.1} parent=1 // loop_body
      %s16 = ssub.s32 %s11, 1
      %s17 = ssub.s32 %s11, 2
      %s18 = sadd.s32 %s11, 1
      %s19 = ssub.s32 %s11, %s18
      %p20 = scmp.eq.s32.totalorder %s19, 0
      %s22 = sadd.s32 %s21, 1
      %s23 = scalar_select %p20, %s21, %s22
      %p26 = pneg %p20
      %p27 = scmp.eq.s32.totalorder %s11, 1
      %p28 = por %p26, %p27
      %p29 = scmp.ne.s32.totalorder %s21, %s24
      %p30 = scmp.eq.s32.totalorder %s11, 0
      %p31 = por %p29, %p30
      %p32 = scmp.ne.s32.totalorder %s21, %s24
      %p33 = scmp.eq.s32.totalorder %s16, 1
      %p34 = por %p32, %p33
      %p35 = scmp.ne.s32.totalorder %s24, %s25
      %p36 = scmp.eq.s32.totalorder %s16, 0
      %p37 = por %p35, %p36
      %p38 = scmp.ne.s32.totalorder %s24, %s25
      %p39 = scmp.eq.s32.totalorder %s17, 1
      %p40 = por %p38, %p39
      %p42 = scmp.ne.s32.totalorder %s25, %s41
      %p43 = scmp.eq.s32.totalorder %s17, 0
      %p44 = por %p42, %p43
      %s46 = sadd.s32 %s45, 1
      %p49 = scmp.eq.s32.totalorder %s11, 1
      %p50 = scmp.ne.s32.totalorder %s45, %s47
      %p51 = scmp.eq.s32.totalorder %s11, 0
      %p52 = por %p50, %p51
      %p53 = scmp.ne.s32.totalorder %s45, %s47
      %p54 = scmp.eq.s32.totalorder %s16, 1
      %p55 = por %p53, %p54
      %p56 = scmp.ne.s32.totalorder %s47, %s48
      %p57 = scmp.eq.s32.totalorder %s16, 0
      %p58 = por %p56, %p57
      %p59 = scmp.ne.s32.totalorder %s47, %s48
      %p60 = scmp.eq.s32.totalorder %s17, 1
      %p61 = por %p59, %p60
      %p63 = scmp.ne.s32.totalorder %s48, %s62
      %p64 = scmp.eq.s32.totalorder %s17, 0
      %p65 = por %p63, %p64
      %s67 = sadd.s32 %s66, 1
      %p70 = scmp.eq.s32.totalorder %s11, 1
      %p71 = scmp.ne.s32.totalorder %s66, %s68
      %p72 = scmp.eq.s32.totalorder %s11, 0
      %p73 = por %p71, %p72
      %p74 = scmp.ne.s32.totalorder %s66, %s68
      %p75 = scmp.eq.s32.totalorder %s16, 1
      %p76 = por %p74, %p75
      %p77 = scmp.ne.s32.totalorder %s68, %s69
      %p78 = scmp.eq.s32.totalorder %s16, 0
      %p79 = por %p77, %p78
      %p80 = scmp.ne.s32.totalorder %s68, %s69
      %p81 = scmp.eq.s32.totalorder %s17, 1
      %p82 = por %p80, %p81
      %p84 = scmp.ne.s32.totalorder %s69, %s83
      %p85 = scmp.eq.s32.totalorder %s17, 0
      %p86 = por %p84, %p85
      %s88 = sadd.s32 %s87, 1
      %p91 = scmp.eq.s32.totalorder %s11, 1
      %p92 = scmp.ne.s32.totalorder %s87, %s89
      %p93 = scmp.eq.s32.totalorder %s11, 0
      %p94 = por %p92, %p93
      %p95 = scmp.ne.s32.totalorder %s87, %s89
      %p96 = scmp.eq.s32.totalorder %s16, 1
      %p97 = por %p95, %p96
      %p98 = scmp.ne.s32.totalorder %s89, %s90
      %p99 = scmp.eq.s32.totalorder %s16, 0
      %p100 = por %p98, %p99
      %p101 = scmp.ne.s32.totalorder %s89, %s90
      %p102 = scmp.eq.s32.totalorder %s17, 1
      %p103 = por %p101, %p102
      %p105 = scmp.ne.s32.totalorder %s90, %s104
      %p106 = scmp.eq.s32.totalorder %s17, 0
      %p107 = por %p105, %p106
      %s109 = sadd.s32 %s108, 1
      %p112 = scmp.eq.s32.totalorder %s11, 1
      %p113 = scmp.ne.s32.totalorder %s108, %s110
      %p114 = scmp.eq.s32.totalorder %s11, 0
      %p115 = por %p113, %p114
      %p116 = scmp.ne.s32.totalorder %s108, %s110
      %p117 = scmp.eq.s32.totalorder %s16, 1
      %p118 = por %p116, %p117
      %p119 = scmp.ne.s32.totalorder %s110, %s111
      %p120 = scmp.eq.s32.totalorder %s16, 0
      %p121 = por %p119, %p120
      %p122 = scmp.ne.s32.totalorder %s110, %s111
      %p123 = scmp.eq.s32.totalorder %s17, 1
      %p124 = por %p122, %p123
      %p126 = scmp.ne.s32.totalorder %s111, %s125
      %p127 = scmp.eq.s32.totalorder %s17, 0
      %p128 = por %p126, %p127
      %s129 = ssub.s32 %s11, %s18
      %p130 = scmp.eq.s32.totalorder %s129, 0
      %s132 = sadd.s32 %s131, 1
      %s133 = scalar_select %p130, %s131, %s132
      %p136 = pneg %p130
      %p137 = scmp.eq.s32.totalorder %s11, 1
      %p138 = por %p136, %p137
      %p139 = scmp.ne.s32.totalorder %s131, %s134
      %p140 = scmp.eq.s32.totalorder %s11, 0
      %p141 = por %p139, %p140
      %p142 = scmp.ne.s32.totalorder %s131, %s134
      %p143 = scmp.eq.s32.totalorder %s16, 1
      %p144 = por %p142, %p143
      %p145 = scmp.ne.s32.totalorder %s134, %s135
      %p146 = scmp.eq.s32.totalorder %s16, 0
      %p147 = por %p145, %p146
      %p148 = scmp.ne.s32.totalorder %s134, %s135
      %p149 = scmp.eq.s32.totalorder %s17, 1
      %p150 = por %p148, %p149
      %p152 = scmp.ne.s32.totalorder %s135, %s151
      %p153 = scmp.eq.s32.totalorder %s17, 0
      %p154 = por %p152, %p153
      %p155 = scmp.le.s32.totalorder 1, %s11
      %p156 = scmp.lt.s32.totalorder %s11, 3
      %p157 = pnand %p155, %p156
      %p158 = pneg %p157
      // Predicated region
      $region9: #{tpu_custom_call.1} parent=5 // pred_check
        _
      $region10: #{tpu_custom_call.1} parent=5 // pred_check_branch
        %160 = sbr.rel (%p157) target = $region12
      $region11: #{tpu_custom_call.1} parent=5 // pred_region
        %s161 = ssub.s32 %s11, 1
        // Predicated region
        $region13: #{tpu_custom_call.1} parent=11 // pred_check
          %p162 = pneg %p58
        $region14: #{tpu_custom_call.1} parent=11 // pred_check_branch
          %164 = sbr.rel (%p162) target = $region16
        $region15: #{tpu_custom_call.1} parent=11 // pred_region
          _
        $region16: #{tpu_custom_call.1} parent=11 // pred_fallthru
          _
        // Predicated region
        $region17: #{tpu_custom_call.1} parent=11 // pred_check
          %p165 = pneg %p79
        $region18: #{tpu_custom_call.1} parent=11 // pred_check_branch
          %167 = sbr.rel (%p165) target = $region20
        $region19: #{tpu_custom_call.1} parent=11 // pred_region
          _
        $region20: #{tpu_custom_call.1} parent=11 // pred_fallthru
          _
        // Predicated region
        $region21: #{tpu_custom_call.1} parent=11 // pred_check
          %p168 = pneg %p100
        $region22: #{tpu_custom_call.1} parent=11 // pred_check_branch
          %170 = sbr.rel (%p168) target = $region24
        $region23: #{tpu_custom_call.1} parent=11 // pred_region
          _
        $region24: #{tpu_custom_call.1} parent=11 // pred_fallthru
          _
        // Predicated region
        $region25: #{tpu_custom_call.1} parent=11 // pred_check
          %p171 = pneg %p121
        $region26: #{tpu_custom_call.1} parent=11 // pred_check_branch
          %173 = sbr.rel (%p171) target = $region28
        $region27: #{tpu_custom_call.1} parent=11 // pred_region
          _
        $region28: #{tpu_custom_call.1} parent=11 // pred_fallthru
          _
      $region12: #{tpu_custom_call.1} parent=5 // pred_fallthru
        _
      %p174 = scmp.lt.s32.totalorder %s11, 2
      // Predicated region
      $region29: #{tpu_custom_call.1} parent=5 // pred_check
        %p175 = pneg %p174
      $region30: #{tpu_custom_call.1} parent=5 // pred_check_branch
        %177 = sbr.rel (%p175) target = $region32
      $region31: #{tpu_custom_call.1} parent=5 // pred_region
        // Predicated region
        $region33: #{tpu_custom_call.1} parent=31 // pred_check
          %p178 = pneg %p31
        $region34: #{tpu_custom_call.1} parent=31 // pred_check_branch
          %180 = sbr.rel (%p178) target = $region36
        $region35: #{tpu_custom_call.1} parent=31 // pred_region
          %s181 = smul.u32 13, %s11
          %s182 = ssub.s32 25, %s181
          %p183 = scmp.lt.s32.totalorder %s182, 13
          %s184 = scalar_select %p183, %s182, 13
          %s185 = smul.u32 128, %s184
          %p186 = scmp.lt.s32.totalorder %s181, 24
          %s187 = scalar_select %p186, %s181, 24
          %s188 = smul.addr %s187, 8
          %s189 = scalar_lea.vmem %s0, %s188
          %s190 = smul.u32 13, %s11
          %s191 = ssub.s32 25, %s190
          %p192 = scmp.lt.s32.totalorder %s191, 13
          %s193 = scalar_select %p192, %s191, 13
          %s194 = smul.u32 128, %s193
        $region36: #{tpu_custom_call.1} parent=31 // pred_fallthru
          _
      $region32: #{tpu_custom_call.1} parent=5 // pred_fallthru
        _
      %p195 = scmp.le.s32.totalorder 1, %s11
      %p196 = scmp.lt.s32.totalorder %s11, 3
      %p197 = pnand %p195, %p196
      %p198 = pneg %p197
      // Predicated region
      $region37: #{tpu_custom_call.1} parent=5 // pred_check
        _
      $region38: #{tpu_custom_call.1} parent=5 // pred_check_branch
        %200 = sbr.rel (%p197) target = $region40
      $region39: #{tpu_custom_call.1} parent=5 // pred_region
        %s201 = ssub.s32 %s11, 1
        %s202 = smul.u32 13, %s16
        %s203 = ssub.s32 25, %s202
        %p204 = scmp.lt.s32.totalorder %s203, 13
        %s205 = scalar_select %p204, %s203, 13
        %s206 = smul.u32 128, %s205
        %p207 = scmp.lt.s32.totalorder %s202, 24
        %s208 = scalar_select %p207, %s202, 24
        %s209 = smul.addr %s208, 8
        %s210 = scalar_lea.vmem %s0, %s209
        %p211 = pneg %p37
        %p212 = pneg %p34
        %p213 = pneg %p58
        %p214 = pneg %p55
        %p215 = pneg %p79
        %p216 = pneg %p76
        %p217 = pneg %p100
        %p218 = pneg %p97
        %p219 = pneg %p121
        %p220 = pneg %p118
        %p221 = pneg %p147
        %p222 = pneg %p144
        %s223 = sand.u32 %s134, 1
        %s224 = sand.u32 %s134, 1
        %s225 = smul.addr %s224, 104
        %s226 = scalar_lea.vmem [#allocation2], %s225
        %s227 = smul.u32 13, %s16
        %s228 = ssub.s32 25, %s227
        %p229 = scmp.lt.s32.totalorder %s228, 13
        %s230 = scalar_select %p229, %s228, 13
        %s231 = smul.u32 128, %s230
        %p232 = scmp.lt.s32.totalorder %s227, 24
        %s233 = scalar_select %p232, %s227, 24
        %s234 = smul.addr %s233, 8
        %s235 = scalar_lea.vmem %s0, %s234
        %s236 = smul.u32 13, %s16
        %s237 = ssub.s32 25, %s236
        %p238 = scmp.lt.s32.totalorder %s237, 13
        %s239 = scalar_select %p238, %s237, 13
        %s240 = smul.u32 128, %s239
        %s241 = smul.u32 13, %s16
        %s242 = ssub.s32 25, %s241
        %p243 = scmp.lt.s32.totalorder %s242, 13
        %s244 = scalar_select %p243, %s242, 13
        %s245 = smul.u32 128, %s244
        %v246 = vld [vmem:[%s235] sm:$0xff]
        %v247 = vld [vmem:[%s235 + $0x8] sm:$0xff]
        %v248 = vld [vmem:[%s235 + $0x10] sm:$0xff]
        %v249 = vld [vmem:[%s235 + $0x18] sm:$0xff]
        %v250 = vld [vmem:[%s235 + $0x20] sm:$0xff]
        %v251 = vld [vmem:[%s235 + $0x28] sm:$0xff]
        %v252 = vld [vmem:[%s235 + $0x30] sm:$0xff]
        %v253 = vld [vmem:[%s235 + $0x38] sm:$0xff]
        %v254 = vld [vmem:[%s235 + $0x40] sm:$0xff]
        %v255 = vld [vmem:[%s235 + $0x48] sm:$0xff]
        %v256 = vld [vmem:[%s235 + $0x50] sm:$0xff]
        %v257 = vld [vmem:[%s235 + $0x58] sm:$0xff]
        %v258 = vld [vmem:[%s235 + $0x60] sm:$0xff]
        %v259 = vld [vmem:[%s1] sm:$0xff]
        %v260 = vld [vmem:[%s1 + $0x8] sm:$0x3]
        %v261 = vld [vmem:[%s2] sm:$0x1]
        %v263 = vlaneseq
        %v264 = vshrl.u32 %v263, 7
        %v265 = vsub.s32 0, %v264
        %v266 = vrot.slane %v261, %v265
        %vm268 = vcmask 80896
        %v270 = vsel %vm268, %v246, 0
        %v273 = vsel %vm268, %v247, 0
        %v276 = vsel %vm268, %v248, 0
        %v279 = vsel %vm268, %v249, 0
        %v282 = vsel %vm268, %v250, 0
        %v285 = vsel %vm268, %v251, 0
        %v288 = vsel %vm268, %v252, 0
        %v291 = vsel %vm268, %v253, 0
        %v294 = vsel %vm268, %v254, 0
        %v297 = vsel %vm268, %v255, 0
        %v300 = vsel %vm268, %v256, 0
        %v303 = vsel %vm268, %v257, 0
        %v306 = vsel %vm268, %v258, 0
        %vm308 = vcmask 1041408
        %v310 = vsel %vm308, %v260, 0
        %312 = vmatprep.subr.mxu0 0.0
        %v313 = vand.u32 %v259, 4294901760
        %314 = vmatpush1.msra.mxu0 %v313
        %315 = vmatprep.subr.mxu0 0.0
        %v316 = vand.u32 %v310, 4294901760
        %317 = vmatpush1.msra.mxu0 %v316
        %318 = vmatprep.subr.mxu0 0.0
        %319 = vmatpush1.msra.mxu0 0.0
        %320 = vmatprep.subr.mxu0 0.0
        %321 = vmatpush1.msra.mxu0 0.0
        %322 = vmatprep.subr.mxu0 0.0
        %323 = vmatpush1.msra.mxu0 0.0
        %324 = vmatprep.subr.mxu0 0.0
        %325 = vmatpush1.msra.mxu0 0.0
        %326 = vmatprep.subr.mxu0 0.0
        %327 = vmatpush1.msra.mxu0 0.0
        %328 = vmatprep.subr.mxu0 0.0
        %329 = vmatpush1.msra.mxu0 0.0
        %330 = vmatprep.subr.mxu0 0.0
        %331 = vmatpush1.msra.mxu0 0.0
        %332 = vmatprep.subr.mxu0 0.0
        %333 = vmatpush1.msra.mxu0 0.0
        %334 = vmatprep.subr.mxu0 0.0
        %335 = vmatpush1.msra.mxu0 0.0
        %336 = vmatprep.subr.mxu0 0.0
        %337 = vmatpush1.msra.mxu0 0.0
        %338 = vmatprep.subr.mxu0 0.0
        %339 = vmatpush1.msra.mxu0 0.0
        %340 = vmatprep.subr.mxu0 0.0
        %341 = vmatpush1.msra.mxu0 0.0
        %342 = vmatprep.subr.mxu0 0.0
        %343 = vmatpush1.msra.mxu0 0.0
        %344 = vmatprep.subr.mxu0 0.0
        %345 = vmatpush1.msra.mxu0 0.0
        %346 = vmatprep.subr.mxu0 0.0
        %347 = vmatpush1.msra.mxu0 0.0
        %348 = vmatprep.subr.mxu0 0.0
        %349 = vmatpush1.msra.mxu0 0.0
        %350 = vmatprep.subr.mxu0 0.0
        %351 = vmatpush1.msra.mxu0 0.0
        %352 = vmatprep.subr.mxu0 0.0
        %353 = vmatpush1.msra.mxu0 0.0
        %354 = vmatprep.subr.mxu0 0.0
        %355 = vmatpush1.msra.mxu0 0.0
        %356 = vmatprep.subr.mxu0 0.0
        %357 = vmatpush1.msra.mxu0 0.0
        %358 = vmatprep.subr.mxu0 0.0
        %359 = vmatpush1.msra.mxu0 0.0
        %360 = vmatprep.subr.mxu0 0.0
        %361 = vmatpush1.msra.mxu0 0.0
        %362 = vmatprep.subr.mxu0 0.0
        %363 = vmatpush1.msra.mxu0 0.0
        %364 = vmatprep.subr.mxu0 0.0
        %365 = vmatpush1.msra.mxu0 0.0
        %366 = vmatprep.subr.mxu0 0.0
        %367 = vmatpush1.msra.mxu0 0.0
        %368 = vmatprep.subr.mxu0 0.0
        %369 = vmatpush1.msra.mxu0 0.0
        %370 = vmatprep.subr.mxu0 0.0
        %371 = vmatpush1.msra.mxu0 0.0
        %372 = vmatprep.subr.mxu0 0.0
        %373 = vmatpush1.msra.mxu0 0.0
        %374 = vmatprep.subr.mxu0 0.0
        %375 = vmatpush1.msra.mxu0 0.0
        %376 = vmatprep.subr.mxu0 0.0
        %377 = vmatpush1.msra.mxu0 0.0
        %378 = vmatprep.mubr.f32.mxu0 0.0
        %v379 = vand.u32 %v270, 4294901760
        %v380 = vsub.f32 %v270, %v379
        %v381 = vand.u32 %v380, 4294901760
        %v382 = vsub.f32 %v380, %v381
        %v383 = vand.u32 %v382, 4294901760
        %384 = vmatmul.mubr.f32.gmra.mrb[0].mxu0 %v383
        %v385 = vpop.f32.mrb[0].mxu0
        %v386 = vadd.f32 %v266, %v385
        %v387 = vpop.f32.mrb[0].mxu0
        %388 = vmatprep.mubr.f32.mxu0 0.0
        %v389 = vand.u32 %v273, 4294901760
        %v390 = vsub.f32 %v273, %v389
        %v391 = vand.u32 %v390, 4294901760
        %v392 = vsub.f32 %v390, %v391
        %v393 = vand.u32 %v392, 4294901760
        %394 = vmatmul.mubr.f32.gmra.mrb[0].mxu0 %v393
        %v395 = vpop.f32.mrb[0].mxu0
        %v396 = vadd.f32 %v266, %v395
        %v397 = vpop.f32.mrb[0].mxu0
        %398 = vmatprep.mubr.f32.mxu0 0.0
        %v399 = vand.u32 %v276, 4294901760
        %v400 = vsub.f32 %v276, %v399
        %v401 = vand.u32 %v400, 4294901760
        %v402 = vsub.f32 %v400, %v401
        %v403 = vand.u32 %v402, 4294901760
        %404 = vmatmul.mubr.f32.gmra.mrb[0].mxu0 %v403
        %v405 = vpop.f32.mrb[0].mxu0
        %v406 = vadd.f32 %v266, %v405
        %v407 = vpop.f32.mrb[0].mxu0
        %408 = vmatprep.mubr.f32.mxu0 0.0
        %v409 = vand.u32 %v279, 4294901760
        %v410 = vsub.f32 %v279, %v409
        %v411 = vand.u32 %v410, 4294901760
        %v412 = vsub.f32 %v410, %v411
        %v413 = vand.u32 %v412, 4294901760
        %414 = vmatmul.mubr.f32.gmra.mrb[0].mxu0 %v413
        %v415 = vpop.f32.mrb[0].mxu0
        %v416 = vadd.f32 %v266, %v415
        %v417 = vpop.f32.mrb[0].mxu0
        %418 = vmatprep.mubr.f32.mxu0 0.0
        %v419 = vand.u32 %v282, 4294901760
        %v420 = vsub.f32 %v282, %v419
        %v421 = vand.u32 %v420, 4294901760
        %v422 = vsub.f32 %v420, %v421
        %v423 = vand.u32 %v422, 4294901760
        %424 = vmatmul.mubr.f32.gmra.mrb[0].mxu0 %v423
        %v425 = vpop.f32.mrb[0].mxu0
        %v426 = vadd.f32 %v266, %v425
        %v427 = vpop.f32.mrb[0].mxu0
        %428 = vmatprep.mubr.f32.mxu0 0.0
        %v429 = vand.u32 %v285, 4294901760
        %v430 = vsub.f32 %v285, %v429
        %v431 = vand.u32 %v430, 4294901760
        %v432 = vsub.f32 %v430, %v431
        %v433 = vand.u32 %v432, 4294901760
        %434 = vmatmul.mubr.f32.gmra.mrb[0].mxu0 %v433
        %v435 = vpop.f32.mrb[0].mxu0
        %v436 = vadd.f32 %v266, %v435
        %v437 = vpop.f32.mrb[0].mxu0
        %438 = vmatprep.mubr.f32.mxu0 0.0
        %v439 = vand.u32 %v288, 4294901760
        %v440 = vsub.f32 %v288, %v439
        %v441 = vand.u32 %v440, 4294901760
        %v442 = vsub.f32 %v440, %v441
        %v443 = vand.u32 %v442, 4294901760
        %444 = vmatmul.mubr.f32.gmra.mrb[0].mxu0 %v443
        %v445 = vpop.f32.mrb[0].mxu0
        %v446 = vadd.f32 %v266, %v445
        %v447 = vpop.f32.mrb[0].mxu0
        %448 = vmatprep.mubr.f32.mxu0 0.0
        %v449 = vand.u32 %v291, 4294901760
        %v450 = vsub.f32 %v291, %v449
        %v451 = vand.u32 %v450, 4294901760
        %v452 = vsub.f32 %v450, %v451
        %v453 = vand.u32 %v452, 4294901760
        %454 = vmatmul.mubr.f32.gmra.mrb[0].mxu0 %v453
        %v455 = vpop.f32.mrb[0].mxu0
        %v456 = vadd.f32 %v266, %v455
        %v457 = vpop.f32.mrb[0].mxu0
        %458 = vmatprep.mubr.f32.mxu0 0.0
        %v459 = vand.u32 %v294, 4294901760
        %v460 = vsub.f32 %v294, %v459
        %v461 = vand.u32 %v460, 4294901760
        %v462 = vsub.f32 %v460, %v461
        %v463 = vand.u32 %v462, 4294901760
        %464 = vmatmul.mubr.f32.gmra.mrb[0].mxu0 %v463
        %v465 = vpop.f32.mrb[0].mxu0
        %v466 = vadd.f32 %v266, %v465
        %v467 = vpop.f32.mrb[0].mxu0
        %468 = vmatprep.mubr.f32.mxu0 0.0
        %v469 = vand.u32 %v297, 4294901760
        %v470 = vsub.f32 %v297, %v469
        %v471 = vand.u32 %v470, 4294901760
        %v472 = vsub.f32 %v470, %v471
        %v473 = vand.u32 %v472, 4294901760
        %474 = vmatmul.mubr.f32.gmra.mrb[0].mxu0 %v473
        %v475 = vpop.f32.mrb[0].mxu0
        %v476 = vadd.f32 %v266, %v475
        %v477 = vpop.f32.mrb[0].mxu0
        %478 = vmatprep.mubr.f32.mxu0 0.0
        %v479 = vand.u32 %v300, 4294901760
        %v480 = vsub.f32 %v300, %v479
        %v481 = vand.u32 %v480, 4294901760
        %v482 = vsub.f32 %v480, %v481
        %v483 = vand.u32 %v482, 4294901760
        %484 = vmatmul.mubr.f32.gmra.mrb[0].mxu0 %v483
        %v485 = vpop.f32.mrb[0].mxu0
        %v486 = vadd.f32 %v266, %v485
        %v487 = vpop.f32.mrb[0].mxu0
        %488 = vmatprep.mubr.f32.mxu0 0.0
        %v489 = vand.u32 %v303, 4294901760
        %v490 = vsub.f32 %v303, %v489
        %v491 = vand.u32 %v490, 4294901760
        %v492 = vsub.f32 %v490, %v491
        %v493 = vand.u32 %v492, 4294901760
        %494 = vmatmul.mubr.f32.gmra.mrb[0].mxu0 %v493
        %v495 = vpop.f32.mrb[0].mxu0
        %v496 = vadd.f32 %v266, %v495
        %v497 = vpop.f32.mrb[0].mxu0
        %498 = vmatprep.mubr.f32.mxu0 0.0
        %v499 = vand.u32 %v306, 4294901760
        %v500 = vsub.f32 %v306, %v499
        %v501 = vand.u32 %v500, 4294901760
        %v502 = vsub.f32 %v500, %v501
        %v503 = vand.u32 %v502, 4294901760
        %504 = vmatmul.mubr.f32.gmra.mrb[0].mxu0 %v503
        %v505 = vpop.f32.mrb[0].mxu0
        %v506 = vadd.f32 %v266, %v505
        %v507 = vpop.f32.mrb[0].mxu0
        %508 = vdwg.mxu0
        %509 = vmatprep.subr.mxu0 0.0
        %v510 = vand.u32 %v259, 4294901760
        %v511 = vsub.f32 %v259, %v510
        %v512 = vand.u32 %v511, 4294901760
        %v513 = vsub.f32 %v511, %v512
        %v514 = vand.u32 %v513, 4294901760
        %515 = vmatpush1.msra.mxu0 %v514
        %516 = vmatprep.subr.mxu0 0.0
        %v517 = vand.u32 %v310, 4294901760
        %v518 = vsub.f32 %v310, %v517
        %v519 = vand.u32 %v518, 4294901760
        %v520 = vsub.f32 %v518, %v519
        %v521 = vand.u32 %v520, 4294901760
        %522 = vmatpush1.msra.mxu0 %v521
        %523 = vmatprep.subr.mxu0 0.0
        %524 = vmatpush1.msra.mxu0 0.0
        %525 = vmatprep.subr.mxu0 0.0
        %526 = vmatpush1.msra.mxu0 0.0
        %527 = vmatprep.subr.mxu0 0.0
        %528 = vmatpush1.msra.mxu0 0.0
        %529 = vmatprep.subr.mxu0 0.0
        %530 = vmatpush1.msra.mxu0 0.0
        %531 = vmatprep.subr.mxu0 0.0
        %532 = vmatpush1.msra.mxu0 0.0
        %533 = vmatprep.subr.mxu0 0.0
        %534 = vmatpush1.msra.mxu0 0.0
        %535 = vmatprep.subr.mxu0 0.0
        %536 = vmatpush1.msra.mxu0 0.0
        %537 = vmatprep.subr.mxu0 0.0
        %538 = vmatpush1.msra.mxu0 0.0
        %539 = vmatprep.subr.mxu0 0.0
        %540 = vmatpush1.msra.mxu0 0.0
        %541 = vmatprep.subr.mxu0 0.0
        %542 = vmatpush1.msra.mxu0 0.0
        %543 = vmatprep.subr.mxu0 0.0
        %544 = vmatpush1.msra.mxu0 0.0
        %545 = vmatprep.subr.mxu0 0.0
        %546 = vmatpush1.msra.mxu0 0.0
        %547 = vmatprep.subr.mxu0 0.0
        %548 = vmatpush1.msra.mxu0 0.0
        %549 = vmatprep.subr.mxu0 0.0
        %550 = vmatpush1.msra.mxu0 0.0
        %551 = vmatprep.subr.mxu0 0.0
        %552 = vmatpush1.msra.mxu0 0.0
        %553 = vmatprep.subr.mxu0 0.0
        %554 = vmatpush1.msra.mxu0 0.0
        %555 = vmatprep.subr.mxu0 0.0
        %556 = vmatpush1.msra.mxu0 0.0
        %557 = vmatprep.subr.mxu0 0.0
        %558 = vmatpush1.msra.mxu0 0.0
        %559 = vmatprep.subr.mxu0 0.0
        %560 = vmatpush1.msra.mxu0 0.0
        %561 = vmatprep.subr.mxu0 0.0
        %562 = vmatpush1.msra.mxu0 0.0
        %563 = vmatprep.subr.mxu0 0.0
        %564 = vmatpush1.msra.mxu0 0.0
        %565 = vmatprep.subr.mxu0 0.0
        %566 = vmatpush1.msra.mxu0 0.0
        %567 = vmatprep.subr.mxu0 0.0
        %568 = vmatpush1.msra.mxu0 0.0
        %569 = vmatprep.subr.mxu0 0.0
        %570 = vmatpush1.msra.mxu0 0.0
        %571 = vmatprep.subr.mxu0 0.0
        %572 = vmatpush1.msra.mxu0 0.0
        %573 = vmatprep.subr.mxu0 0.0
        %574 = vmatpush1.msra.mxu0 0.0
        %575 = vmatprep.subr.mxu0 0.0
        %576 = vmatpush1.msra.mxu0 0.0
        %577 = vmatprep.subr.mxu0 0.0
        %578 = vmatpush1.msra.mxu0 0.0
        %579 = vmatprep.subr.mxu0 0.0
        %580 = vmatpush1.msra.mxu0 0.0
        %581 = vmatprep.subr.mxu0 0.0
        %582 = vmatpush1.msra.mxu0 0.0
        %583 = vmatprep.mubr.f32.mxu0 0.0
        %v584 = vand.u32 %v270, 4294901760
        %585 = vmatmul.mubr.f32.gmra.mrb[0].mxu0 %v584
        %v586 = vpop.f32.mrb[0].mxu0
        %v587 = vadd.f32 %v386, %v586
        %v588 = vpop.f32.mrb[0].mxu0
        %589 = vmatprep.mubr.f32.mxu0 0.0
        %v590 = vand.u32 %v273, 4294901760
        %591 = vmatmul.mubr.f32.gmra.mrb[0].mxu0 %v590
        %v592 = vpop.f32.mrb[0].mxu0
        %v593 = vadd.f32 %v396, %v592
        %v594 = vpop.f32.mrb[0].mxu0
        %595 = vmatprep.mubr.f32.mxu0 0.0
        %v596 = vand.u32 %v276, 4294901760
        %597 = vmatmul.mubr.f32.gmra.mrb[0].mxu0 %v596
        %v598 = vpop.f32.mrb[0].mxu0
        %v599 = vadd.f32 %v406, %v598
        %v600 = vpop.f32.mrb[0].mxu0
        %601 = vmatprep.mubr.f32.mxu0 0.0
        %v602 = vand.u32 %v279, 4294901760
        %603 = vmatmul.mubr.f32.gmra.mrb[0].mxu0 %v602
        %v604 = vpop.f32.mrb[0].mxu0
        %v605 = vadd.f32 %v416, %v604
        %v606 = vpop.f32.mrb[0].mxu0
        %607 = vmatprep.mubr.f32.mxu0 0.0
        %v608 = vand.u32 %v282, 4294901760
        %609 = vmatmul.mubr.f32.gmra.mrb[0].mxu0 %v608
        %v610 = vpop.f32.mrb[0].mxu0
        %v611 = vadd.f32 %v426, %v610
        %v612 = vpop.f32.mrb[0].mxu0
        %613 = vmatprep.mubr.f32.mxu0 0.0
        %v614 = vand.u32 %v285, 4294901760
        %615 = vmatmul.mubr.f32.gmra.mrb[0].mxu0 %v614
        %v616 = vpop.f32.mrb[0].mxu0
        %v617 = vadd.f32 %v436, %v616
        %v618 = vpop.f32.mrb[0].mxu0
        %619 = vmatprep.mubr.f32.mxu0 0.0
        %v620 = vand.u32 %v288, 4294901760
        %621 = vmatmul.mubr.f32.gmra.mrb[0].mxu0 %v620
        %v622 = vpop.f32.mrb[0].mxu0
        %v623 = vadd.f32 %v446, %v622
        %v624 = vpop.f32.mrb[0].mxu0
        %625 = vmatprep.mubr.f32.mxu0 0.0
        %v626 = vand.u32 %v291, 4294901760
        %627 = vmatmul.mubr.f32.gmra.mrb[0].mxu0 %v626
        %v628 = vpop.f32.mrb[0].mxu0
        %v629 = vadd.f32 %v456, %v628
        %v630 = vpop.f32.mrb[0].mxu0
        %631 = vmatprep.mubr.f32.mxu0 0.0
        %v632 = vand.u32 %v294, 4294901760
        %633 = vmatmul.mubr.f32.gmra.mrb[0].mxu0 %v632
        %v634 = vpop.f32.mrb[0].mxu0
        %v635 = vadd.f32 %v466, %v634
        %v636 = vpop.f32.mrb[0].mxu0
        %637 = vmatprep.mubr.f32.mxu0 0.0
        %v638 = vand.u32 %v297, 4294901760
        %639 = vmatmul.mubr.f32.gmra.mrb[0].mxu0 %v638
        %v640 = vpop.f32.mrb[0].mxu0
        %v641 = vadd.f32 %v476, %v640
        %v642 = vpop.f32.mrb[0].mxu0
        %643 = vmatprep.mubr.f32.mxu0 0.0
        %v644 = vand.u32 %v300, 4294901760
        %645 = vmatmul.mubr.f32.gmra.mrb[0].mxu0 %v644
        %v646 = vpop.f32.mrb[0].mxu0
        %v647 = vadd.f32 %v486, %v646
        %v648 = vpop.f32.mrb[0].mxu0
        %649 = vmatprep.mubr.f32.mxu0 0.0
        %v650 = vand.u32 %v303, 4294901760
        %651 = vmatmul.mubr.f32.gmra.mrb[0].mxu0 %v650
        %v652 = vpop.f32.mrb[0].mxu0
        %v653 = vadd.f32 %v496, %v652
        %v654 = vpop.f32.mrb[0].mxu0
        %655 = vmatprep.mubr.f32.mxu0 0.0
        %v656 = vand.u32 %v306, 4294901760
        %657 = vmatmul.mubr.f32.gmra.mrb[0].mxu0 %v656
        %v658 = vpop.f32.mrb[0].mxu0
        %v659 = vadd.f32 %v506, %v658
        %v660 = vpop.f32.mrb[0].mxu0
        %661 = vdwg.mxu0
        %662 = vmatprep.subr.mxu0 0.0
        %v663 = vand.u32 %v259, 4294901760
        %v664 = vsub.f32 %v259, %v663
        %665 = vmatpush1.msra.mxu0 %v664
        %666 = vmatprep.subr.mxu0 0.0
        %v667 = vand.u32 %v310, 4294901760
        %v668 = vsub.f32 %v310, %v667
        %669 = vmatpush1.msra.mxu0 %v668
        %670 = vmatprep.subr.mxu0 0.0
        %671 = vmatpush1.msra.mxu0 0.0
        %672 = vmatprep.subr.mxu0 0.0
        %673 = vmatpush1.msra.mxu0 0.0
        %674 = vmatprep.subr.mxu0 0.0
        %675 = vmatpush1.msra.mxu0 0.0
        %676 = vmatprep.subr.mxu0 0.0
        %677 = vmatpush1.msra.mxu0 0.0
        %678 = vmatprep.subr.mxu0 0.0
        %679 = vmatpush1.msra.mxu0 0.0
        %680 = vmatprep.subr.mxu0 0.0
        %681 = vmatpush1.msra.mxu0 0.0
        %682 = vmatprep.subr.mxu0 0.0
        %683 = vmatpush1.msra.mxu0 0.0
        %684 = vmatprep.subr.mxu0 0.0
        %685 = vmatpush1.msra.mxu0 0.0
        %686 = vmatprep.subr.mxu0 0.0
        %687 = vmatpush1.msra.mxu0 0.0
        %688 = vmatprep.subr.mxu0 0.0
        %689 = vmatpush1.msra.mxu0 0.0
        %690 = vmatprep.subr.mxu0 0.0
        %691 = vmatpush1.msra.mxu0 0.0
        %692 = vmatprep.subr.mxu0 0.0
        %693 = vmatpush1.msra.mxu0 0.0
        %694 = vmatprep.subr.mxu0 0.0
        %695 = vmatpush1.msra.mxu0 0.0
        %696 = vmatprep.subr.mxu0 0.0
        %697 = vmatpush1.msra.mxu0 0.0
        %698 = vmatprep.subr.mxu0 0.0
        %699 = vmatpush1.msra.mxu0 0.0
        %700 = vmatprep.subr.mxu0 0.0
        %701 = vmatpush1.msra.mxu0 0.0
        %702 = vmatprep.subr.mxu0 0.0
        %703 = vmatpush1.msra.mxu0 0.0
        %704 = vmatprep.subr.mxu0 0.0
        %705 = vmatpush1.msra.mxu0 0.0
        %706 = vmatprep.subr.mxu0 0.0
        %707 = vmatpush1.msra.mxu0 0.0
        %708 = vmatprep.subr.mxu0 0.0
        %709 = vmatpush1.msra.mxu0 0.0
        %710 = vmatprep.subr.mxu0 0.0
        %711 = vmatpush1.msra.mxu0 0.0
        %712 = vmatprep.subr.mxu0 0.0
        %713 = vmatpush1.msra.mxu0 0.0
        %714 = vmatprep.subr.mxu0 0.0
        %715 = vmatpush1.msra.mxu0 0.0
        %716 = vmatprep.subr.mxu0 0.0
        %717 = vmatpush1.msra.mxu0 0.0
        %718 = vmatprep.subr.mxu0 0.0
        %719 = vmatpush1.msra.mxu0 0.0
        %720 = vmatprep.subr.mxu0 0.0
        %721 = vmatpush1.msra.mxu0 0.0
        %722 = vmatprep.subr.mxu0 0.0
        %723 = vmatpush1.msra.mxu0 0.0
        %724 = vmatprep.subr.mxu0 0.0
        %725 = vmatpush1.msra.mxu0 0.0
        %726 = vmatprep.subr.mxu0 0.0
        %727 = vmatpush1.msra.mxu0 0.0
        %728 = vmatprep.subr.mxu0 0.0
        %729 = vmatpush1.msra.mxu0 0.0
        %730 = vmatprep.mubr.f32.mxu0 0.0
        %v731 = vand.u32 %v270, 4294901760
        %v732 = vsub.f32 %v270, %v731
        %733 = vmatmul.mubr.f32.gmra.mrb[0].mxu0 %v732
        %v734 = vpop.f32.mrb[0].mxu0
        %v735 = vadd.f32 %v587, %v734
        %v736 = vpop.f32.mrb[0].mxu0
        %737 = vmatprep.mubr.f32.mxu0 0.0
        %v738 = vand.u32 %v273, 4294901760
        %v739 = vsub.f32 %v273, %v738
        %740 = vmatmul.mubr.f32.gmra.mrb[0].mxu0 %v739
        %v741 = vpop.f32.mrb[0].mxu0
        %v742 = vadd.f32 %v593, %v741
        %v743 = vpop.f32.mrb[0].mxu0
        %744 = vmatprep.mubr.f32.mxu0 0.0
        %v745 = vand.u32 %v276, 4294901760
        %v746 = vsub.f32 %v276, %v745
        %747 = vmatmul.mubr.f32.gmra.mrb[0].mxu0 %v746
        %v748 = vpop.f32.mrb[0].mxu0
        %v749 = vadd.f32 %v599, %v748
        %v750 = vpop.f32.mrb[0].mxu0
        %751 = vmatprep.mubr.f32.mxu0 0.0
        %v752 = vand.u32 %v279, 4294901760
        %v753 = vsub.f32 %v279, %v752
        %754 = vmatmul.mubr.f32.gmra.mrb[0].mxu0 %v753
        %v755 = vpop.f32.mrb[0].mxu0
        %v756 = vadd.f32 %v605, %v755
        %v757 = vpop.f32.mrb[0].mxu0
        %758 = vmatprep.mubr.f32.mxu0 0.0
        %v759 = vand.u32 %v282, 4294901760
        %v760 = vsub.f32 %v282, %v759
        %761 = vmatmul.mubr.f32.gmra.mrb[0].mxu0 %v760
        %v762 = vpop.f32.mrb[0].mxu0
        %v763 = vadd.f32 %v611, %v762
        %v764 = vpop.f32.mrb[0].mxu0
        %765 = vmatprep.mubr.f32.mxu0 0.0
        %v766 = vand.u32 %v285, 4294901760
        %v767 = vsub.f32 %v285, %v766
        %768 = vmatmul.mubr.f32.gmra.mrb[0].mxu0 %v767
        %v769 = vpop.f32.mrb[0].mxu0
        %v770 = vadd.f32 %v617, %v769
        %v771 = vpop.f32.mrb[0].mxu0
        %772 = vmatprep.mubr.f32.mxu0 0.0
        %v773 = vand.u32 %v288, 4294901760
        %v774 = vsub.f32 %v288, %v773
        %775 = vmatmul.mubr.f32.gmra.mrb[0].mxu0 %v774
        %v776 = vpop.f32.mrb[0].mxu0
        %v777 = vadd.f32 %v623, %v776
        %v778 = vpop.f32.mrb[0].mxu0
        %779 = vmatprep.mubr.f32.mxu0 0.0
        %v780 = vand.u32 %v291, 4294901760
        %v781 = vsub.f32 %v291, %v780
        %782 = vmatmul.mubr.f32.gmra.mrb[0].mxu0 %v781
        %v783 = vpop.f32.mrb[0].mxu0
        %v784 = vadd.f32 %v629, %v783
        %v785 = vpop.f32.mrb[0].mxu0
        %786 = vmatprep.mubr.f32.mxu0 0.0
        %v787 = vand.u32 %v294, 4294901760
        %v788 = vsub.f32 %v294, %v787
        %789 = vmatmul.mubr.f32.gmra.mrb[0].mxu0 %v788
        %v790 = vpop.f32.mrb[0].mxu0
        %v791 = vadd.f32 %v635, %v790
        %v792 = vpop.f32.mrb[0].mxu0
        %793 = vmatprep.mubr.f32.mxu0 0.0
        %v794 = vand.u32 %v297, 4294901760
        %v795 = vsub.f32 %v297, %v794
        %796 = vmatmul.mubr.f32.gmra.mrb[0].mxu0 %v795
        %v797 = vpop.f32.mrb[0].mxu0
        %v798 = vadd.f32 %v641, %v797
        %v799 = vpop.f32.mrb[0].mxu0
        %800 = vmatprep.mubr.f32.mxu0 0.0
        %v801 = vand.u32 %v300, 4294901760
        %v802 = vsub.f32 %v300, %v801
        %803 = vmatmul.mubr.f32.gmra.mrb[0].mxu0 %v802
        %v804 = vpop.f32.mrb[0].mxu0
        %v805 = vadd.f32 %v647, %v804
        %v806 = vpop.f32.mrb[0].mxu0
        %807 = vmatprep.mubr.f32.mxu0 0.0
        %v808 = vand.u32 %v303, 4294901760
        %v809 = vsub.f32 %v303, %v808
        %810 = vmatmul.mubr.f32.gmra.mrb[0].mxu0 %v809
        %v811 = vpop.f32.mrb[0].mxu0
        %v812 = vadd.f32 %v653, %v811
        %v813 = vpop.f32.mrb[0].mxu0
        %814 = vmatprep.mubr.f32.mxu0 0.0
        %v815 = vand.u32 %v306, 4294901760
        %v816 = vsub.f32 %v306, %v815
        %817 = vmatmul.mubr.f32.gmra.mrb[0].mxu0 %v816
        %v818 = vpop.f32.mrb[0].mxu0
        %v819 = vadd.f32 %v659, %v818
        %v820 = vpop.f32.mrb[0].mxu0
        %821 = vdwg.mxu0
        %822 = vmatprep.subr.mxu0 0.0
        %v823 = vand.u32 %v259, 4294901760
        %824 = vmatpush1.msra.mxu0 %v823
        %825 = vmatprep.subr.mxu0 0.0
        %v826 = vand.u32 %v310, 4294901760
        %827 = vmatpush1.msra.mxu0 %v826
        %828 = vmatprep.subr.mxu0 0.0
        %829 = vmatpush1.msra.mxu0 0.0
        %830 = vmatprep.subr.mxu0 0.0
        %831 = vmatpush1.msra.mxu0 0.0
        %832 = vmatprep.subr.mxu0 0.0
        %833 = vmatpush1.msra.mxu0 0.0
        %834 = vmatprep.subr.mxu0 0.0
        %835 = vmatpush1.msra.mxu0 0.0
        %836 = vmatprep.subr.mxu0 0.0
        %837 = vmatpush1.msra.mxu0 0.0
        %838 = vmatprep.subr.mxu0 0.0
        %839 = vmatpush1.msra.mxu0 0.0
        %840 = vmatprep.subr.mxu0 0.0
        %841 = vmatpush1.msra.mxu0 0.0
        %842 = vmatprep.subr.mxu0 0.0
        %843 = vmatpush1.msra.mxu0 0.0
        %844 = vmatprep.subr.mxu0 0.0
        %845 = vmatpush1.msra.mxu0 0.0
        %846 = vmatprep.subr.mxu0 0.0
        %847 = vmatpush1.msra.mxu0 0.0
        %848 = vmatprep.subr.mxu0 0.0
        %849 = vmatpush1.msra.mxu0 0.0
        %850 = vmatprep.subr.mxu0 0.0
        %851 = vmatpush1.msra.mxu0 0.0
        %852 = vmatprep.subr.mxu0 0.0
        %853 = vmatpush1.msra.mxu0 0.0
        %854 = vmatprep.subr.mxu0 0.0
        %855 = vmatpush1.msra.mxu0 0.0
        %856 = vmatprep.subr.mxu0 0.0
        %857 = vmatpush1.msra.mxu0 0.0
        %858 = vmatprep.subr.mxu0 0.0
        %859 = vmatpush1.msra.mxu0 0.0
        %860 = vmatprep.subr.mxu0 0.0
        %861 = vmatpush1.msra.mxu0 0.0
        %862 = vmatprep.subr.mxu0 0.0
        %863 = vmatpush1.msra.mxu0 0.0
        %864 = vmatprep.subr.mxu0 0.0
        %865 = vmatpush1.msra.mxu0 0.0
        %866 = vmatprep.subr.mxu0 0.0
        %867 = vmatpush1.msra.mxu0 0.0
        %868 = vmatprep.subr.mxu0 0.0
        %869 = vmatpush1.msra.mxu0 0.0
        %870 = vmatprep.subr.mxu0 0.0
        %871 = vmatpush1.msra.mxu0 0.0
        %872 = vmatprep.subr.mxu0 0.0
        %873 = vmatpush1.msra.mxu0 0.0
        %874 = vmatprep.subr.mxu0 0.0
        %875 = vmatpush1.msra.mxu0 0.0
        %876 = vmatprep.subr.mxu0 0.0
        %877 = vmatpush1.msra.mxu0 0.0
        %878 = vmatprep.subr.mxu0 0.0
        %879 = vmatpush1.msra.mxu0 0.0
        %880 = vmatprep.subr.mxu0 0.0
        %881 = vmatpush1.msra.mxu0 0.0
        %882 = vmatprep.subr.mxu0 0.0
        %883 = vmatpush1.msra.mxu0 0.0
        %884 = vmatprep.subr.mxu0 0.0
        %885 = vmatpush1.msra.mxu0 0.0
        %886 = vmatprep.subr.mxu0 0.0
        %887 = vmatpush1.msra.mxu0 0.0
        %888 = vmatprep.mubr.f32.mxu0 0.0
        %v889 = vand.u32 %v270, 4294901760
        %v890 = vsub.f32 %v270, %v889
        %v891 = vand.u32 %v890, 4294901760
        %892 = vmatmul.mubr.f32.gmra.mrb[0].mxu0 %v891
        %v893 = vpop.f32.mrb[0].mxu0
        %v894 = vadd.f32 %v735, %v893
        %v895 = vpop.f32.mrb[0].mxu0
        %896 = vmatprep.mubr.f32.mxu0 0.0
        %v897 = vand.u32 %v273, 4294901760
        %v898 = vsub.f32 %v273, %v897
        %v899 = vand.u32 %v898, 4294901760
        %900 = vmatmul.mubr.f32.gmra.mrb[0].mxu0 %v899
        %v901 = vpop.f32.mrb[0].mxu0
        %v902 = vadd.f32 %v742, %v901
        %v903 = vpop.f32.mrb[0].mxu0
        %904 = vmatprep.mubr.f32.mxu0 0.0
        %v905 = vand.u32 %v276, 4294901760
        %v906 = vsub.f32 %v276, %v905
        %v907 = vand.u32 %v906, 4294901760
        %908 = vmatmul.mubr.f32.gmra.mrb[0].mxu0 %v907
        %v909 = vpop.f32.mrb[0].mxu0
        %v910 = vadd.f32 %v749, %v909
        %v911 = vpop.f32.mrb[0].mxu0
        %912 = vmatprep.mubr.f32.mxu0 0.0
        %v913 = vand.u32 %v279, 4294901760
        %v914 = vsub.f32 %v279, %v913
        %v915 = vand.u32 %v914, 4294901760
        %916 = vmatmul.mubr.f32.gmra.mrb[0].mxu0 %v915
        %v917 = vpop.f32.mrb[0].mxu0
        %v918 = vadd.f32 %v756, %v917
        %v919 = vpop.f32.mrb[0].mxu0
        %920 = vmatprep.mubr.f32.mxu0 0.0
        %v921 = vand.u32 %v282, 4294901760
        %v922 = vsub.f32 %v282, %v921
        %v923 = vand.u32 %v922, 4294901760
        %924 = vmatmul.mubr.f32.gmra.mrb[0].mxu0 %v923
        %v925 = vpop.f32.mrb[0].mxu0
        %v926 = vadd.f32 %v763, %v925
        %v927 = vpop.f32.mrb[0].mxu0
        %928 = vmatprep.mubr.f32.mxu0 0.0
        %v929 = vand.u32 %v285, 4294901760
        %v930 = vsub.f32 %v285, %v929
        %v931 = vand.u32 %v930, 4294901760
        %932 = vmatmul.mubr.f32.gmra.mrb[0].mxu0 %v931
        %v933 = vpop.f32.mrb[0].mxu0
        %v934 = vadd.f32 %v770, %v933
        %v935 = vpop.f32.mrb[0].mxu0
        %936 = vmatprep.mubr.f32.mxu0 0.0
        %v937 = vand.u32 %v288, 4294901760
        %v938 = vsub.f32 %v288, %v937
        %v939 = vand.u32 %v938, 4294901760
        %940 = vmatmul.mubr.f32.gmra.mrb[0].mxu0 %v939
        %v941 = vpop.f32.mrb[0].mxu0
        %v942 = vadd.f32 %v777, %v941
        %v943 = vpop.f32.mrb[0].mxu0
        %944 = vmatprep.mubr.f32.mxu0 0.0
        %v945 = vand.u32 %v291, 4294901760
        %v946 = vsub.f32 %v291, %v945
        %v947 = vand.u32 %v946, 4294901760
        %948 = vmatmul.mubr.f32.gmra.mrb[0].mxu0 %v947
        %v949 = vpop.f32.mrb[0].mxu0
        %v950 = vadd.f32 %v784, %v949
        %v951 = vpop.f32.mrb[0].mxu0
        %952 = vmatprep.mubr.f32.mxu0 0.0
        %v953 = vand.u32 %v294, 4294901760
        %v954 = vsub.f32 %v294, %v953
        %v955 = vand.u32 %v954, 4294901760
        %956 = vmatmul.mubr.f32.gmra.mrb[0].mxu0 %v955
        %v957 = vpop.f32.mrb[0].mxu0
        %v958 = vadd.f32 %v791, %v957
        %v959 = vpop.f32.mrb[0].mxu0
        %960 = vmatprep.mubr.f32.mxu0 0.0
        %v961 = vand.u32 %v297, 4294901760
        %v962 = vsub.f32 %v297, %v961
        %v963 = vand.u32 %v962, 4294901760
        %964 = vmatmul.mubr.f32.gmra.mrb[0].mxu0 %v963
        %v965 = vpop.f32.mrb[0].mxu0
        %v966 = vadd.f32 %v798, %v965
        %v967 = vpop.f32.mrb[0].mxu0
        %968 = vmatprep.mubr.f32.mxu0 0.0
        %v969 = vand.u32 %v300, 4294901760
        %v970 = vsub.f32 %v300, %v969
        %v971 = vand.u32 %v970, 4294901760
        %972 = vmatmul.mubr.f32.gmra.mrb[0].mxu0 %v971
        %v973 = vpop.f32.mrb[0].mxu0
        %v974 = vadd.f32 %v805, %v973
        %v975 = vpop.f32.mrb[0].mxu0
        %976 = vmatprep.mubr.f32.mxu0 0.0
        %v977 = vand.u32 %v303, 4294901760
        %v978 = vsub.f32 %v303, %v977
        %v979 = vand.u32 %v978, 4294901760
        %980 = vmatmul.mubr.f32.gmra.mrb[0].mxu0 %v979
        %v981 = vpop.f32.mrb[0].mxu0
        %v982 = vadd.f32 %v812, %v981
        %v983 = vpop.f32.mrb[0].mxu0
        %984 = vmatprep.mubr.f32.mxu0 0.0
        %v985 = vand.u32 %v306, 4294901760
        %v986 = vsub.f32 %v306, %v985
        %v987 = vand.u32 %v986, 4294901760
        %988 = vmatmul.mubr.f32.gmra.mrb[0].mxu0 %v987
        %v989 = vpop.f32.mrb[0].mxu0
        %v990 = vadd.f32 %v819, %v989
        %v991 = vpop.f32.mrb[0].mxu0
        %992 = vdwg.mxu0
        %993 = vmatprep.subr.mxu0 0.0
        %v994 = vand.u32 %v259, 4294901760
        %v995 = vsub.f32 %v259, %v994
        %v996 = vand.u32 %v995, 4294901760
        %997 = vmatpush1.msra.mxu0 %v996
        %998 = vmatprep.subr.mxu0 0.0
        %v999 = vand.u32 %v310, 4294901760
        %v1000 = vsub.f32 %v310, %v999
        %v1001 = vand.u32 %v1000, 4294901760
        %1002 = vmatpush1.msra.mxu0 %v1001
        %1003 = vmatprep.subr.mxu0 0.0
        %1004 = vmatpush1.msra.mxu0 0.0
        %1005 = vmatprep.subr.mxu0 0.0
        %1006 = vmatpush1.msra.mxu0 0.0
        %1007 = vmatprep.subr.mxu0 0.0
        %1008 = vmatpush1.msra.mxu0 0.0
        %1009 = vmatprep.subr.mxu0 0.0
        %1010 = vmatpush1.msra.mxu0 0.0
        %1011 = vmatprep.subr.mxu0 0.0
        %1012 = vmatpush1.msra.mxu0 0.0
        %1013 = vmatprep.subr.mxu0 0.0
        %1014 = vmatpush1.msra.mxu0 0.0
        %1015 = vmatprep.subr.mxu0 0.0
        %1016 = vmatpush1.msra.mxu0 0.0
        %1017 = vmatprep.subr.mxu0 0.0
        %1018 = vmatpush1.msra.mxu0 0.0
        %1019 = vmatprep.subr.mxu0 0.0
        %1020 = vmatpush1.msra.mxu0 0.0
        %1021 = vmatprep.subr.mxu0 0.0
        %1022 = vmatpush1.msra.mxu0 0.0
        %1023 = vmatprep.subr.mxu0 0.0
        %1024 = vmatpush1.msra.mxu0 0.0
        %1025 = vmatprep.subr.mxu0 0.0
        %1026 = vmatpush1.msra.mxu0 0.0
        %1027 = vmatprep.subr.mxu0 0.0
        %1028 = vmatpush1.msra.mxu0 0.0
        %1029 = vmatprep.subr.mxu0 0.0
        %1030 = vmatpush1.msra.mxu0 0.0
        %1031 = vmatprep.subr.mxu0 0.0
        %1032 = vmatpush1.msra.mxu0 0.0
        %1033 = vmatprep.subr.mxu0 0.0
        %1034 = vmatpush1.msra.mxu0 0.0
        %1035 = vmatprep.subr.mxu0 0.0
        %1036 = vmatpush1.msra.mxu0 0.0
        %1037 = vmatprep.subr.mxu0 0.0
        %1038 = vmatpush1.msra.mxu0 0.0
        %1039 = vmatprep.subr.mxu0 0.0
        %1040 = vmatpush1.msra.mxu0 0.0
        %1041 = vmatprep.subr.mxu0 0.0
        %1042 = vmatpush1.msra.mxu0 0.0
        %1043 = vmatprep.subr.mxu0 0.0
        %1044 = vmatpush1.msra.mxu0 0.0
        %1045 = vmatprep.subr.mxu0 0.0
        %1046 = vmatpush1.msra.mxu0 0.0
        %1047 = vmatprep.subr.mxu0 0.0
        %1048 = vmatpush1.msra.mxu0 0.0
        %1049 = vmatprep.subr.mxu0 0.0
        %1050 = vmatpush1.msra.mxu0 0.0
        %1051 = vmatprep.subr.mxu0 0.0
        %1052 = vmatpush1.msra.mxu0 0.0
        %1053 = vmatprep.subr.mxu0 0.0
        %1054 = vmatpush1.msra.mxu0 0.0
        %1055 = vmatprep.subr.mxu0 0.0
        %1056 = vmatpush1.msra.mxu0 0.0
        %1057 = vmatprep.subr.mxu0 0.0
        %1058 = vmatpush1.msra.mxu0 0.0
        %1059 = vmatprep.subr.mxu0 0.0
        %1060 = vmatpush1.msra.mxu0 0.0
        %1061 = vmatprep.subr.mxu0 0.0
        %1062 = vmatpush1.msra.mxu0 0.0
        %1063 = vmatprep.mubr.f32.mxu0 0.0
        %v1064 = vand.u32 %v270, 4294901760
        %1065 = vmatmul.mubr.f32.gmra.mrb[0].mxu0 %v1064
        %v1066 = vpop.f32.mrb[0].mxu0
        %v1067 = vadd.f32 %v894, %v1066
        %v1068 = vpop.f32.mrb[0].mxu0
        %1069 = vmatprep.mubr.f32.mxu0 0.0
        %v1070 = vand.u32 %v273, 4294901760
        %1071 = vmatmul.mubr.f32.gmra.mrb[0].mxu0 %v1070
        %v1072 = vpop.f32.mrb[0].mxu0
        %v1073 = vadd.f32 %v902, %v1072
        %v1074 = vpop.f32.mrb[0].mxu0
        %1075 = vmatprep.mubr.f32.mxu0 0.0
        %v1076 = vand.u32 %v276, 4294901760
        %1077 = vmatmul.mubr.f32.gmra.mrb[0].mxu0 %v1076
        %v1078 = vpop.f32.mrb[0].mxu0
        %v1079 = vadd.f32 %v910, %v1078
        %v1080 = vpop.f32.mrb[0].mxu0
        %1081 = vmatprep.mubr.f32.mxu0 0.0
        %v1082 = vand.u32 %v279, 4294901760
        %1083 = vmatmul.mubr.f32.gmra.mrb[0].mxu0 %v1082
        %v1084 = vpop.f32.mrb[0].mxu0
        %v1085 = vadd.f32 %v918, %v1084
        %v1086 = vpop.f32.mrb[0].mxu0
        %1087 = vmatprep.mubr.f32.mxu0 0.0
        %v1088 = vand.u32 %v282, 4294901760
        %1089 = vmatmul.mubr.f32.gmra.mrb[0].mxu0 %v1088
        %v1090 = vpop.f32.mrb[0].mxu0
        %v1091 = vadd.f32 %v926, %v1090
        %v1092 = vpop.f32.mrb[0].mxu0
        %1093 = vmatprep.mubr.f32.mxu0 0.0
        %v1094 = vand.u32 %v285, 4294901760
        %1095 = vmatmul.mubr.f32.gmra.mrb[0].mxu0 %v1094
        %v1096 = vpop.f32.mrb[0].mxu0
        %v1097 = vadd.f32 %v934, %v1096
        %v1098 = vpop.f32.mrb[0].mxu0
        %1099 = vmatprep.mubr.f32.mxu0 0.0
        %v1100 = vand.u32 %v288, 4294901760
        %1101 = vmatmul.mubr.f32.gmra.mrb[0].mxu0 %v1100
        %v1102 = vpop.f32.mrb[0].mxu0
        %v1103 = vadd.f32 %v942, %v1102
        %v1104 = vpop.f32.mrb[0].mxu0
        %1105 = vmatprep.mubr.f32.mxu0 0.0
        %v1106 = vand.u32 %v291, 4294901760
        %1107 = vmatmul.mubr.f32.gmra.mrb[0].mxu0 %v1106
        %v1108 = vpop.f32.mrb[0].mxu0
        %v1109 = vadd.f32 %v950, %v1108
        %v1110 = vpop.f32.mrb[0].mxu0
        %1111 = vmatprep.mubr.f32.mxu0 0.0
        %v1112 = vand.u32 %v294, 4294901760
        %1113 = vmatmul.mubr.f32.gmra.mrb[0].mxu0 %v1112
        %v1114 = vpop.f32.mrb[0].mxu0
        %v1115 = vadd.f32 %v958, %v1114
        %v1116 = vpop.f32.mrb[0].mxu0
        %1117 = vmatprep.mubr.f32.mxu0 0.0
        %v1118 = vand.u32 %v297, 4294901760
        %1119 = vmatmul.mubr.f32.gmra.mrb[0].mxu0 %v1118
        %v1120 = vpop.f32.mrb[0].mxu0
        %v1121 = vadd.f32 %v966, %v1120
        %v1122 = vpop.f32.mrb[0].mxu0
        %1123 = vmatprep.mubr.f32.mxu0 0.0
        %v1124 = vand.u32 %v300, 4294901760
        %1125 = vmatmul.mubr.f32.gmra.mrb[0].mxu0 %v1124
        %v1126 = vpop.f32.mrb[0].mxu0
        %v1127 = vadd.f32 %v974, %v1126
        %v1128 = vpop.f32.mrb[0].mxu0
        %1129 = vmatprep.mubr.f32.mxu0 0.0
        %v1130 = vand.u32 %v303, 4294901760
        %1131 = vmatmul.mubr.f32.gmra.mrb[0].mxu0 %v1130
        %v1132 = vpop.f32.mrb[0].mxu0
        %v1133 = vadd.f32 %v982, %v1132
        %v1134 = vpop.f32.mrb[0].mxu0
        %1135 = vmatprep.mubr.f32.mxu0 0.0
        %v1136 = vand.u32 %v306, 4294901760
        %1137 = vmatmul.mubr.f32.gmra.mrb[0].mxu0 %v1136
        %v1138 = vpop.f32.mrb[0].mxu0
        %v1139 = vadd.f32 %v990, %v1138
        %v1140 = vpop.f32.mrb[0].mxu0
        %1141 = vdwg.mxu0
        %1142 = vmatprep.subr.mxu0 0.0
        %v1143 = vand.u32 %v259, 4294901760
        %1144 = vmatpush1.msra.mxu0 %v1143
        %1145 = vmatprep.subr.mxu0 0.0
        %v1146 = vand.u32 %v310, 4294901760
        %1147 = vmatpush1.msra.mxu0 %v1146
        %1148 = vmatprep.subr.mxu0 0.0
        %1149 = vmatpush1.msra.mxu0 0.0
        %1150 = vmatprep.subr.mxu0 0.0
        %1151 = vmatpush1.msra.mxu0 0.0
        %1152 = vmatprep.subr.mxu0 0.0
        %1153 = vmatpush1.msra.mxu0 0.0
        %1154 = vmatprep.subr.mxu0 0.0
        %1155 = vmatpush1.msra.mxu0 0.0
        %1156 = vmatprep.subr.mxu0 0.0
        %1157 = vmatpush1.msra.mxu0 0.0
        %1158 = vmatprep.subr.mxu0 0.0
        %1159 = vmatpush1.msra.mxu0 0.0
        %1160 = vmatprep.subr.mxu0 0.0
        %1161 = vmatpush1.msra.mxu0 0.0
        %1162 = vmatprep.subr.mxu0 0.0
        %1163 = vmatpush1.msra.mxu0 0.0
        %1164 = vmatprep.subr.mxu0 0.0
        %1165 = vmatpush1.msra.mxu0 0.0
        %1166 = vmatprep.subr.mxu0 0.0
        %1167 = vmatpush1.msra.mxu0 0.0
        %1168 = vmatprep.subr.mxu0 0.0
        %1169 = vmatpush1.msra.mxu0 0.0
        %1170 = vmatprep.subr.mxu0 0.0
        %1171 = vmatpush1.msra.mxu0 0.0
        %1172 = vmatprep.subr.mxu0 0.0
        %1173 = vmatpush1.msra.mxu0 0.0
        %1174 = vmatprep.subr.mxu0 0.0
        %1175 = vmatpush1.msra.mxu0 0.0
        %1176 = vmatprep.subr.mxu0 0.0
        %1177 = vmatpush1.msra.mxu0 0.0
        %1178 = vmatprep.subr.mxu0 0.0
        %1179 = vmatpush1.msra.mxu0 0.0
        %1180 = vmatprep.subr.mxu0 0.0
        %1181 = vmatpush1.msra.mxu0 0.0
        %1182 = vmatprep.subr.mxu0 0.0
        %1183 = vmatpush1.msra.mxu0 0.0
        %1184 = vmatprep.subr.mxu0 0.0
        %1185 = vmatpush1.msra.mxu0 0.0
        %1186 = vmatprep.subr.mxu0 0.0
        %1187 = vmatpush1.msra.mxu0 0.0
        %1188 = vmatprep.subr.mxu0 0.0
        %1189 = vmatpush1.msra.mxu0 0.0
        %1190 = vmatprep.subr.mxu0 0.0
        %1191 = vmatpush1.msra.mxu0 0.0
        %1192 = vmatprep.subr.mxu0 0.0
        %1193 = vmatpush1.msra.mxu0 0.0
        %1194 = vmatprep.subr.mxu0 0.0
        %1195 = vmatpush1.msra.mxu0 0.0
        %1196 = vmatprep.subr.mxu0 0.0
        %1197 = vmatpush1.msra.mxu0 0.0
        %1198 = vmatprep.subr.mxu0 0.0
        %1199 = vmatpush1.msra.mxu0 0.0
        %1200 = vmatprep.subr.mxu0 0.0
        %1201 = vmatpush1.msra.mxu0 0.0
        %1202 = vmatprep.subr.mxu0 0.0
        %1203 = vmatpush1.msra.mxu0 0.0
        %1204 = vmatprep.subr.mxu0 0.0
        %1205 = vmatpush1.msra.mxu0 0.0
        %1206 = vmatprep.subr.mxu0 0.0
        %1207 = vmatpush1.msra.mxu0 0.0
        %1208 = vmatprep.mubr.f32.mxu0 0.0
        %v1209 = vand.u32 %v270, 4294901760
        %1210 = vmatmul.mubr.f32.gmra.mrb[0].mxu0 %v1209
        %v1211 = vpop.f32.mrb[0].mxu0
        %v1212 = vadd.f32 %v1067, %v1211
        %v1213 = vpop.f32.mrb[0].mxu0
        %1214 = vmatprep.mubr.f32.mxu0 0.0
        %v1215 = vand.u32 %v273, 4294901760
        %1216 = vmatmul.mubr.f32.gmra.mrb[0].mxu0 %v1215
        %v1217 = vpop.f32.mrb[0].mxu0
        %v1218 = vadd.f32 %v1073, %v1217
        %v1219 = vpop.f32.mrb[0].mxu0
        %1220 = vmatprep.mubr.f32.mxu0 0.0
        %v1221 = vand.u32 %v276, 4294901760
        %1222 = vmatmul.mubr.f32.gmra.mrb[0].mxu0 %v1221
        %v1223 = vpop.f32.mrb[0].mxu0
        %v1224 = vadd.f32 %v1079, %v1223
        %v1225 = vpop.f32.mrb[0].mxu0
        %1226 = vmatprep.mubr.f32.mxu0 0.0
        %v1227 = vand.u32 %v279, 4294901760
        %1228 = vmatmul.mubr.f32.gmra.mrb[0].mxu0 %v1227
        %v1229 = vpop.f32.mrb[0].mxu0
        %v1230 = vadd.f32 %v1085, %v1229
        %v1231 = vpop.f32.mrb[0].mxu0
        %1232 = vmatprep.mubr.f32.mxu0 0.0
        %v1233 = vand.u32 %v282, 4294901760
        %1234 = vmatmul.mubr.f32.gmra.mrb[0].mxu0 %v1233
        %v1235 = vpop.f32.mrb[0].mxu0
        %v1236 = vadd.f32 %v1091, %v1235
        %v1237 = vpop.f32.mrb[0].mxu0
        %1238 = vmatprep.mubr.f32.mxu0 0.0
        %v1239 = vand.u32 %v285, 4294901760
        %1240 = vmatmul.mubr.f32.gmra.mrb[0].mxu0 %v1239
        %v1241 = vpop.f32.mrb[0].mxu0
        %v1242 = vadd.f32 %v1097, %v1241
        %v1243 = vpop.f32.mrb[0].mxu0
        %1244 = vmatprep.mubr.f32.mxu0 0.0
        %v1245 = vand.u32 %v288, 4294901760
        %1246 = vmatmul.mubr.f32.gmra.mrb[0].mxu0 %v1245
        %v1247 = vpop.f32.mrb[0].mxu0
        %v1248 = vadd.f32 %v1103, %v1247
        %v1249 = vpop.f32.mrb[0].mxu0
        %1250 = vmatprep.mubr.f32.mxu0 0.0
        %v1251 = vand.u32 %v291, 4294901760
        %1252 = vmatmul.mubr.f32.gmra.mrb[0].mxu0 %v1251
        %v1253 = vpop.f32.mrb[0].mxu0
        %v1254 = vadd.f32 %v1109, %v1253
        %v1255 = vpop.f32.mrb[0].mxu0
        %1256 = vmatprep.mubr.f32.mxu0 0.0
        %v1257 = vand.u32 %v294, 4294901760
        %1258 = vmatmul.mubr.f32.gmra.mrb[0].mxu0 %v1257
        %v1259 = vpop.f32.mrb[0].mxu0
        %v1260 = vadd.f32 %v1115, %v1259
        %v1261 = vpop.f32.mrb[0].mxu0
        %1262 = vmatprep.mubr.f32.mxu0 0.0
        %v1263 = vand.u32 %v297, 4294901760
        %1264 = vmatmul.mubr.f32.gmra.mrb[0].mxu0 %v1263
        %v1265 = vpop.f32.mrb[0].mxu0
        %v1266 = vadd.f32 %v1121, %v1265
        %v1267 = vpop.f32.mrb[0].mxu0
        %1268 = vmatprep.mubr.f32.mxu0 0.0
        %v1269 = vand.u32 %v300, 4294901760
        %1270 = vmatmul.mubr.f32.gmra.mrb[0].mxu0 %v1269
        %v1271 = vpop.f32.mrb[0].mxu0
        %v1272 = vadd.f32 %v1127, %v1271
        %v1273 = vpop.f32.mrb[0].mxu0
        %1274 = vmatprep.mubr.f32.mxu0 0.0
        %v1275 = vand.u32 %v303, 4294901760
        %1276 = vmatmul.mubr.f32.gmra.mrb[0].mxu0 %v1275
        %v1277 = vpop.f32.mrb[0].mxu0
        %v1278 = vadd.f32 %v1133, %v1277
        %v1279 = vpop.f32.mrb[0].mxu0
        %1280 = vmatprep.mubr.f32.mxu0 0.0
        %v1281 = vand.u32 %v306, 4294901760
        %1282 = vmatmul.mubr.f32.gmra.mrb[0].mxu0 %v1281
        %v1283 = vpop.f32.mrb[0].mxu0
        %v1284 = vadd.f32 %v1139, %v1283
        %v1285 = vpop.f32.mrb[0].mxu0
        %1286 = vdwg.mxu0
        %v1287 = vmax.f32 %v1212, 0.0
        %v1288 = vmax.f32 %v1218, 0.0
        %v1289 = vmax.f32 %v1224, 0.0
        %v1290 = vmax.f32 %v1230, 0.0
        %v1291 = vmax.f32 %v1236, 0.0
        %v1292 = vmax.f32 %v1242, 0.0
        %v1293 = vmax.f32 %v1248, 0.0
        %v1294 = vmax.f32 %v1254, 0.0
        %v1295 = vmax.f32 %v1260, 0.0
        %v1296 = vmax.f32 %v1266, 0.0
        %v1297 = vmax.f32 %v1272, 0.0
        %v1298 = vmax.f32 %v1278, 0.0
        %v1299 = vmax.f32 %v1284, 0.0
        %v1300 = vld [vmem:[%s3] sm:$0xff]
        %v1301 = vld [vmem:[%s3 + $0x8] sm:$0xff]
        %v1302 = vld [vmem:[%s3 + $0x10] sm:$0xff]
        %v1303 = vld [vmem:[%s3 + $0x18] sm:$0xff]
        %v1304 = vld [vmem:[%s3 + $0x20] sm:$0xff]
        %v1305 = vld [vmem:[%s3 + $0x28] sm:$0xff]
        %v1306 = vld [vmem:[%s3 + $0x30] sm:$0xff]
        %v1307 = vld [vmem:[%s3 + $0x38] sm:$0xff]
        %v1308 = vld [vmem:[%s3 + $0x40] sm:$0xff]
        %v1309 = vld [vmem:[%s3 + $0x48] sm:$0xff]
        %v1310 = vld [vmem:[%s3 + $0x50] sm:$0xff]
        %v1311 = vld [vmem:[%s3 + $0x58] sm:$0xff]
        %v1312 = vld [vmem:[%s3 + $0x60] sm:$0xff]
        %v1313 = vld [vmem:[%s3 + $0x68] sm:$0xff]
        %v1314 = vld [vmem:[%s3 + $0x70] sm:$0xff]
        %v1315 = vld [vmem:[%s3 + $0x78] sm:$0xff]
        %v1316 = vld [vmem:[%s4] sm:$0x1]
        %v1318 = vlaneseq
        %v1319 = vshrl.u32 %v1318, 7
        %v1320 = vsub.s32 0, %v1319
        %v1321 = vrot.slane %v1316, %v1320
        %1323 = vmatprep.subr.mxu0 0.0
        %v1324 = vand.u32 %v1300, 4294901760
        %1325 = vmatpush1.msra.mxu0 %v1324
        %1326 = vmatprep.subr.mxu0 0.0
        %v1327 = vand.u32 %v1301, 4294901760
        %1328 = vmatpush1.msra.mxu0 %v1327
        %1329 = vmatprep.subr.mxu0 0.0
        %v1330 = vand.u32 %v1302, 4294901760
        %1331 = vmatpush1.msra.mxu0 %v1330
        %1332 = vmatprep.subr.mxu0 0.0
        %v1333 = vand.u32 %v1303, 4294901760
        %1334 = vmatpush1.msra.mxu0 %v1333
        %1335 = vmatprep.subr.mxu0 0.0
        %v1336 = vand.u32 %v1304, 4294901760
        %1337 = vmatpush1.msra.mxu0 %v1336
        %1338 = vmatprep.subr.mxu0 0.0
        %v1339 = vand.u32 %v1305, 4294901760
        %1340 = vmatpush1.msra.mxu0 %v1339
        %1341 = vmatprep.subr.mxu0 0.0
        %v1342 = vand.u32 %v1306, 4294901760
        %1343 = vmatpush1.msra.mxu0 %v1342
        %1344 = vmatprep.subr.mxu0 0.0
        %v1345 = vand.u32 %v1307, 4294901760
        %1346 = vmatpush1.msra.mxu0 %v1345
        %1347 = vmatprep.subr.mxu0 0.0
        %v1348 = vand.u32 %v1308, 4294901760
        %1349 = vmatpush1.msra.mxu0 %v1348
        %1350 = vmatprep.subr.mxu0 0.0
        %v1351 = vand.u32 %v1309, 4294901760
        %1352 = vmatpush1.msra.mxu0 %v1351
        %1353 = vmatprep.subr.mxu0 0.0
        %v1354 = vand.u32 %v1310, 4294901760
        %1355 = vmatpush1.msra.mxu0 %v1354
        %1356 = vmatprep.subr.mxu0 0.0
        %v1357 = vand.u32 %v1311, 4294901760
        %1358 = vmatpush1.msra.mxu0 %v1357
        %1359 = vmatprep.subr.mxu0 0.0
        %v1360 = vand.u32 %v1312, 4294901760
        %1361 = vmatpush1.msra.mxu0 %v1360
        %1362 = vmatprep.subr.mxu0 0.0
        %v1363 = vand.u32 %v1313, 4294901760
        %1364 = vmatpush1.msra.mxu0 %v1363
        %1365 = vmatprep.subr.mxu0 0.0
        %v1366 = vand.u32 %v1314, 4294901760
        %1367 = vmatpush1.msra.mxu0 %v1366
        %1368 = vmatprep.subr.mxu0 0.0
        %v1369 = vand.u32 %v1315, 4294901760
        %1370 = vmatpush1.msra.mxu0 %v1369
        %1371 = vmatprep.subr.mxu0 0.0
        %1372 = vmatpush1.msra.mxu0 0.0
        %1373 = vmatprep.subr.mxu0 0.0
        %1374 = vmatpush1.msra.mxu0 0.0
        %1375 = vmatprep.subr.mxu0 0.0
        %1376 = vmatpush1.msra.mxu0 0.0
        %1377 = vmatprep.subr.mxu0 0.0
        %1378 = vmatpush1.msra.mxu0 0.0
        %1379 = vmatprep.subr.mxu0 0.0
        %1380 = vmatpush1.msra.mxu0 0.0
        %1381 = vmatprep.subr.mxu0 0.0
        %1382 = vmatpush1.msra.mxu0 0.0
        %1383 = vmatprep.subr.mxu0 0.0
        %1384 = vmatpush1.msra.mxu0 0.0
        %1385 = vmatprep.subr.mxu0 0.0
        %1386 = vmatpush1.msra.mxu0 0.0
        %1387 = vmatprep.subr.mxu0 0.0
        %1388 = vmatpush1.msra.mxu0 0.0
        %1389 = vmatprep.subr.mxu0 0.0
        %1390 = vmatpush1.msra.mxu0 0.0
        %1391 = vmatprep.subr.mxu0 0.0
        %1392 = vmatpush1.msra.mxu0 0.0
        %1393 = vmatprep.subr.mxu0 0.0
        %1394 = vmatpush1.msra.mxu0 0.0
        %1395 = vmatprep.subr.mxu0 0.0
        %1396 = vmatpush1.msra.mxu0 0.0
        %1397 = vmatprep.subr.mxu0 0.0
        %1398 = vmatpush1.msra.mxu0 0.0
        %1399 = vmatprep.subr.mxu0 0.0
        %1400 = vmatpush1.msra.mxu0 0.0
        %1401 = vmatprep.subr.mxu0 0.0
        %1402 = vmatpush1.msra.mxu0 0.0
        %1403 = vmatprep.mubr.f32.mxu0 0.0
        %v1404 = vand.u32 %v1287, 4294901760
        %v1405 = vsub.f32 %v1287, %v1404
        %v1406 = vand.u32 %v1405, 4294901760
        %v1407 = vsub.f32 %v1405, %v1406
        %v1408 = vand.u32 %v1407, 4294901760
        %1409 = vmatmul.mubr.f32.gmra.mrb[0].mxu0 %v1408
        %v1410 = vpop.f32.mrb[0].mxu0
        %v1411 = vadd.f32 %v1321, %v1410
        %v1412 = vpop.f32.mrb[0].mxu0
        %1413 = vmatprep.mubr.f32.mxu0 0.0
        %v1414 = vand.u32 %v1288, 4294901760
        %v1415 = vsub.f32 %v1288, %v1414
        %v1416 = vand.u32 %v1415, 4294901760
        %v1417 = vsub.f32 %v1415, %v1416
        %v1418 = vand.u32 %v1417, 4294901760
        %1419 = vmatmul.mubr.f32.gmra.mrb[0].mxu0 %v1418
        %v1420 = vpop.f32.mrb[0].mxu0
        %v1421 = vadd.f32 %v1321, %v1420
        %v1422 = vpop.f32.mrb[0].mxu0
        %1423 = vmatprep.mubr.f32.mxu0 0.0
        %v1424 = vand.u32 %v1289, 4294901760
        %v1425 = vsub.f32 %v1289, %v1424
        %v1426 = vand.u32 %v1425, 4294901760
        %v1427 = vsub.f32 %v1425, %v1426
        %v1428 = vand.u32 %v1427, 4294901760
        %1429 = vmatmul.mubr.f32.gmra.mrb[0].mxu0 %v1428
        %v1430 = vpop.f32.mrb[0].mxu0
        %v1431 = vadd.f32 %v1321, %v1430
        %v1432 = vpop.f32.mrb[0].mxu0
        %1433 = vmatprep.mubr.f32.mxu0 0.0
        %v1434 = vand.u32 %v1290, 4294901760
        %v1435 = vsub.f32 %v1290, %v1434
        %v1436 = vand.u32 %v1435, 4294901760
        %v1437 = vsub.f32 %v1435, %v1436
        %v1438 = vand.u32 %v1437, 4294901760
        %1439 = vmatmul.mubr.f32.gmra.mrb[0].mxu0 %v1438
        %v1440 = vpop.f32.mrb[0].mxu0
        %v1441 = vadd.f32 %v1321, %v1440
        %v1442 = vpop.f32.mrb[0].mxu0
        %1443 = vmatprep.mubr.f32.mxu0 0.0
        %v1444 = vand.u32 %v1291, 4294901760
        %v1445 = vsub.f32 %v1291, %v1444
        %v1446 = vand.u32 %v1445, 4294901760
        %v1447 = vsub.f32 %v1445, %v1446
        %v1448 = vand.u32 %v1447, 4294901760
        %1449 = vmatmul.mubr.f32.gmra.mrb[0].mxu0 %v1448
        %v1450 = vpop.f32.mrb[0].mxu0
        %v1451 = vadd.f32 %v1321, %v1450
        %v1452 = vpop.f32.mrb[0].mxu0
        %1453 = vmatprep.mubr.f32.mxu0 0.0
        %v1454 = vand.u32 %v1292, 4294901760
        %v1455 = vsub.f32 %v1292, %v1454
        %v1456 = vand.u32 %v1455, 4294901760
        %v1457 = vsub.f32 %v1455, %v1456
        %v1458 = vand.u32 %v1457, 4294901760
        %1459 = vmatmul.mubr.f32.gmra.mrb[0].mxu0 %v1458
        %v1460 = vpop.f32.mrb[0].mxu0
        %v1461 = vadd.f32 %v1321, %v1460
        %v1462 = vpop.f32.mrb[0].mxu0
        %1463 = vmatprep.mubr.f32.mxu0 0.0
        %v1464 = vand.u32 %v1293, 4294901760
        %v1465 = vsub.f32 %v1293, %v1464
        %v1466 = vand.u32 %v1465, 4294901760
        %v1467 = vsub.f32 %v1465, %v1466
        %v1468 = vand.u32 %v1467, 4294901760
        %1469 = vmatmul.mubr.f32.gmra.mrb[0].mxu0 %v1468
        %v1470 = vpop.f32.mrb[0].mxu0
        %v1471 = vadd.f32 %v1321, %v1470
        %v1472 = vpop.f32.mrb[0].mxu0
        %1473 = vmatprep.mubr.f32.mxu0 0.0
        %v1474 = vand.u32 %v1294, 4294901760
        %v1475 = vsub.f32 %v1294, %v1474
        %v1476 = vand.u32 %v1475, 4294901760
        %v1477 = vsub.f32 %v1475, %v1476
        %v1478 = vand.u32 %v1477, 4294901760
        %1479 = vmatmul.mubr.f32.gmra.mrb[0].mxu0 %v1478
        %v1480 = vpop.f32.mrb[0].mxu0
        %v1481 = vadd.f32 %v1321, %v1480
        %v1482 = vpop.f32.mrb[0].mxu0
        %1483 = vmatprep.mubr.f32.mxu0 0.0
        %v1484 = vand.u32 %v1295, 4294901760
        %v1485 = vsub.f32 %v1295, %v1484
        %v1486 = vand.u32 %v1485, 4294901760
        %v1487 = vsub.f32 %v1485, %v1486
        %v1488 = vand.u32 %v1487, 4294901760
        %1489 = vmatmul.mubr.f32.gmra.mrb[0].mxu0 %v1488
        %v1490 = vpop.f32.mrb[0].mxu0
        %v1491 = vadd.f32 %v1321, %v1490
        %v1492 = vpop.f32.mrb[0].mxu0
        %1493 = vmatprep.mubr.f32.mxu0 0.0
        %v1494 = vand.u32 %v1296, 4294901760
        %v1495 = vsub.f32 %v1296, %v1494
        %v1496 = vand.u32 %v1495, 4294901760
        %v1497 = vsub.f32 %v1495, %v1496
        %v1498 = vand.u32 %v1497, 4294901760
        %1499 = vmatmul.mubr.f32.gmra.mrb[0].mxu0 %v1498
        %v1500 = vpop.f32.mrb[0].mxu0
        %v1501 = vadd.f32 %v1321, %v1500
        %v1502 = vpop.f32.mrb[0].mxu0
        %1503 = vmatprep.mubr.f32.mxu0 0.0
        %v1504 = vand.u32 %v1297, 4294901760
        %v1505 = vsub.f32 %v1297, %v1504
        %v1506 = vand.u32 %v1505, 4294901760
        %v1507 = vsub.f32 %v1505, %v1506
        %v1508 = vand.u32 %v1507, 4294901760
        %1509 = vmatmul.mubr.f32.gmra.mrb[0].mxu0 %v1508
        %v1510 = vpop.f32.mrb[0].mxu0
        %v1511 = vadd.f32 %v1321, %v1510
        %v1512 = vpop.f32.mrb[0].mxu0
        %1513 = vmatprep.mubr.f32.mxu0 0.0
        %v1514 = vand.u32 %v1298, 4294901760
        %v1515 = vsub.f32 %v1298, %v1514
        %v1516 = vand.u32 %v1515, 4294901760
        %v1517 = vsub.f32 %v1515, %v1516
        %v1518 = vand.u32 %v1517, 4294901760
        %1519 = vmatmul.mubr.f32.gmra.mrb[0].mxu0 %v1518
        %v1520 = vpop.f32.mrb[0].mxu0
        %v1521 = vadd.f32 %v1321, %v1520
        %v1522 = vpop.f32.mrb[0].mxu0
        %1523 = vmatprep.mubr.f32.mxu0 0.0
        %v1524 = vand.u32 %v1299, 4294901760
        %v1525 = vsub.f32 %v1299, %v1524
        %v1526 = vand.u32 %v1525, 4294901760
        %v1527 = vsub.f32 %v1525, %v1526
        %v1528 = vand.u32 %v1527, 4294901760
        %1529 = vmatmul.mubr.f32.gmra.mrb[0].mxu0 %v1528
        %v1530 = vpop.f32.mrb[0].mxu0
        %v1531 = vadd.f32 %v1321, %v1530
        %v1532 = vpop.f32.mrb[0].mxu0
        %1533 = vdwg.mxu0
        %1534 = vmatprep.subr.mxu0 0.0
        %v1535 = vand.u32 %v1300, 4294901760
        %v1536 = vsub.f32 %v1300, %v1535
        %v1537 = vand.u32 %v1536, 4294901760
        %v1538 = vsub.f32 %v1536, %v1537
        %v1539 = vand.u32 %v1538, 4294901760
        %1540 = vmatpush1.msra.mxu0 %v1539
        %1541 = vmatprep.subr.mxu0 0.0
        %v1542 = vand.u32 %v1301, 4294901760
        %v1543 = vsub.f32 %v1301, %v1542
        %v1544 = vand.u32 %v1543, 4294901760
        %v1545 = vsub.f32 %v1543, %v1544
        %v1546 = vand.u32 %v1545, 4294901760
        %1547 = vmatpush1.msra.mxu0 %v1546
        %1548 = vmatprep.subr.mxu0 0.0
        %v1549 = vand.u32 %v1302, 4294901760
        %v1550 = vsub.f32 %v1302, %v1549
        %v1551 = vand.u32 %v1550, 4294901760
        %v1552 = vsub.f32 %v1550, %v1551
        %v1553 = vand.u32 %v1552, 4294901760
        %1554 = vmatpush1.msra.mxu0 %v1553
        %1555 = vmatprep.subr.mxu0 0.0
        %v1556 = vand.u32 %v1303, 4294901760
        %v1557 = vsub.f32 %v1303, %v1556
        %v1558 = vand.u32 %v1557, 4294901760
        %v1559 = vsub.f32 %v1557, %v1558
        %v1560 = vand.u32 %v1559, 4294901760
        %1561 = vmatpush1.msra.mxu0 %v1560
        %1562 = vmatprep.subr.mxu0 0.0
        %v1563 = vand.u32 %v1304, 4294901760
        %v1564 = vsub.f32 %v1304, %v1563
        %v1565 = vand.u32 %v1564, 4294901760
        %v1566 = vsub.f32 %v1564, %v1565
        %v1567 = vand.u32 %v1566, 4294901760
        %1568 = vmatpush1.msra.mxu0 %v1567
        %1569 = vmatprep.subr.mxu0 0.0
        %v1570 = vand.u32 %v1305, 4294901760
        %v1571 = vsub.f32 %v1305, %v1570
        %v1572 = vand.u32 %v1571, 4294901760
        %v1573 = vsub.f32 %v1571, %v1572
        %v1574 = vand.u32 %v1573, 4294901760
        %1575 = vmatpush1.msra.mxu0 %v1574
        %1576 = vmatprep.subr.mxu0 0.0
        %v1577 = vand.u32 %v1306, 4294901760
        %v1578 = vsub.f32 %v1306, %v1577
        %v1579 = vand.u32 %v1578, 4294901760
        %v1580 = vsub.f32 %v1578, %v1579
        %v1581 = vand.u32 %v1580, 4294901760
        %1582 = vmatpush1.msra.mxu0 %v1581
        %1583 = vmatprep.subr.mxu0 0.0
        %v1584 = vand.u32 %v1307, 4294901760
        %v1585 = vsub.f32 %v1307, %v1584
        %v1586 = vand.u32 %v1585, 4294901760
        %v1587 = vsub.f32 %v1585, %v1586
        %v1588 = vand.u32 %v1587, 4294901760
        %1589 = vmatpush1.msra.mxu0 %v1588
        %1590 = vmatprep.subr.mxu0 0.0
        %v1591 = vand.u32 %v1308, 4294901760
        %v1592 = vsub.f32 %v1308, %v1591
        %v1593 = vand.u32 %v1592, 4294901760
        %v1594 = vsub.f32 %v1592, %v1593
        %v1595 = vand.u32 %v1594, 4294901760
        %1596 = vmatpush1.msra.mxu0 %v1595
        %1597 = vmatprep.subr.mxu0 0.0
        %v1598 = vand.u32 %v1309, 4294901760
        %v1599 = vsub.f32 %v1309, %v1598
        %v1600 = vand.u32 %v1599, 4294901760
        %v1601 = vsub.f32 %v1599, %v1600
        %v1602 = vand.u32 %v1601, 4294901760
        %1603 = vmatpush1.msra.mxu0 %v1602
        %1604 = vmatprep.subr.mxu0 0.0
        %v1605 = vand.u32 %v1310, 4294901760
        %v1606 = vsub.f32 %v1310, %v1605
        %v1607 = vand.u32 %v1606, 4294901760
        %v1608 = vsub.f32 %v1606, %v1607
        %v1609 = vand.u32 %v1608, 4294901760
        %1610 = vmatpush1.msra.mxu0 %v1609
        %1611 = vmatprep.subr.mxu0 0.0
        %v1612 = vand.u32 %v1311, 4294901760
        %v1613 = vsub.f32 %v1311, %v1612
        %v1614 = vand.u32 %v1613, 4294901760
        %v1615 = vsub.f32 %v1613, %v1614
        %v1616 = vand.u32 %v1615, 4294901760
        %1617 = vmatpush1.msra.mxu0 %v1616
        %1618 = vmatprep.subr.mxu0 0.0
        %v1619 = vand.u32 %v1312, 4294901760
        %v1620 = vsub.f32 %v1312, %v1619
        %v1621 = vand.u32 %v1620, 4294901760
        %v1622 = vsub.f32 %v1620, %v1621
        %v1623 = vand.u32 %v1622, 4294901760
        %1624 = vmatpush1.msra.mxu0 %v1623
        %1625 = vmatprep.subr.mxu0 0.0
        %v1626 = vand.u32 %v1313, 4294901760
        %v1627 = vsub.f32 %v1313, %v1626
        %v1628 = vand.u32 %v1627, 4294901760
        %v1629 = vsub.f32 %v1627, %v1628
        %v1630 = vand.u32 %v1629, 4294901760
        %1631 = vmatpush1.msra.mxu0 %v1630
        %1632 = vmatprep.subr.mxu0 0.0
        %v1633 = vand.u32 %v1314, 4294901760
        %v1634 = vsub.f32 %v1314, %v1633
        %v1635 = vand.u32 %v1634, 4294901760
        %v1636 = vsub.f32 %v1634, %v1635
        %v1637 = vand.u32 %v1636, 4294901760
        %1638 = vmatpush1.msra.mxu0 %v1637
        %1639 = vmatprep.subr.mxu0 0.0
        %v1640 = vand.u32 %v1315, 4294901760
        %v1641 = vsub.f32 %v1315, %v1640
        %v1642 = vand.u32 %v1641, 4294901760
        %v1643 = vsub.f32 %v1641, %v1642
        %v1644 = vand.u32 %v1643, 4294901760
        %1645 = vmatpush1.msra.mxu0 %v1644
        %1646 = vmatprep.subr.mxu0 0.0
        %1647 = vmatpush1.msra.mxu0 0.0
        %1648 = vmatprep.subr.mxu0 0.0
        %1649 = vmatpush1.msra.mxu0 0.0
        %1650 = vmatprep.subr.mxu0 0.0
        %1651 = vmatpush1.msra.mxu0 0.0
        %1652 = vmatprep.subr.mxu0 0.0
        %1653 = vmatpush1.msra.mxu0 0.0
        %1654 = vmatprep.subr.mxu0 0.0
        %1655 = vmatpush1.msra.mxu0 0.0
        %1656 = vmatprep.subr.mxu0 0.0
        %1657 = vmatpush1.msra.mxu0 0.0
        %1658 = vmatprep.subr.mxu0 0.0
        %1659 = vmatpush1.msra.mxu0 0.0
        %1660 = vmatprep.subr.mxu0 0.0
        %1661 = vmatpush1.msra.mxu0 0.0
        %1662 = vmatprep.subr.mxu0 0.0
        %1663 = vmatpush1.msra.mxu0 0.0
        %1664 = vmatprep.subr.mxu0 0.0
        %1665 = vmatpush1.msra.mxu0 0.0
        %1666 = vmatprep.subr.mxu0 0.0
        %1667 = vmatpush1.msra.mxu0 0.0
        %1668 = vmatprep.subr.mxu0 0.0
        %1669 = vmatpush1.msra.mxu0 0.0
        %1670 = vmatprep.subr.mxu0 0.0
        %1671 = vmatpush1.msra.mxu0 0.0
        %1672 = vmatprep.subr.mxu0 0.0
        %1673 = vmatpush1.msra.mxu0 0.0
        %1674 = vmatprep.subr.mxu0 0.0
        %1675 = vmatpush1.msra.mxu0 0.0
        %1676 = vmatprep.subr.mxu0 0.0
        %1677 = vmatpush1.msra.mxu0 0.0
        %1678 = vmatprep.mubr.f32.mxu0 0.0
        %v1679 = vand.u32 %v1287, 4294901760
        %1680 = vmatmul.mubr.f32.gmra.mrb[0].mxu0 %v1679
        %v1681 = vpop.f32.mrb[0].mxu0
        %v1682 = vadd.f32 %v1411, %v1681
        %v1683 = vpop.f32.mrb[0].mxu0
        %1684 = vmatprep.mubr.f32.mxu0 0.0
        %v1685 = vand.u32 %v1288, 4294901760
        %1686 = vmatmul.mubr.f32.gmra.mrb[0].mxu0 %v1685
        %v1687 = vpop.f32.mrb[0].mxu0
        %v1688 = vadd.f32 %v1421, %v1687
        %v1689 = vpop.f32.mrb[0].mxu0
        %1690 = vmatprep.mubr.f32.mxu0 0.0
        %v1691 = vand.u32 %v1289, 4294901760
        %1692 = vmatmul.mubr.f32.gmra.mrb[0].mxu0 %v1691
        %v1693 = vpop.f32.mrb[0].mxu0
        %v1694 = vadd.f32 %v1431, %v1693
        %v1695 = vpop.f32.mrb[0].mxu0
        %1696 = vmatprep.mubr.f32.mxu0 0.0
        %v1697 = vand.u32 %v1290, 4294901760
        %1698 = vmatmul.mubr.f32.gmra.mrb[0].mxu0 %v1697
        %v1699 = vpop.f32.mrb[0].mxu0
        %v1700 = vadd.f32 %v1441, %v1699
        %v1701 = vpop.f32.mrb[0].mxu0
        %1702 = vmatprep.mubr.f32.mxu0 0.0
        %v1703 = vand.u32 %v1291, 4294901760
        %1704 = vmatmul.mubr.f32.gmra.mrb[0].mxu0 %v1703
        %v1705 = vpop.f32.mrb[0].mxu0
        %v1706 = vadd.f32 %v1451, %v1705
        %v1707 = vpop.f32.mrb[0].mxu0
        %1708 = vmatprep.mubr.f32.mxu0 0.0
        %v1709 = vand.u32 %v1292, 4294901760
        %1710 = vmatmul.mubr.f32.gmra.mrb[0].mxu0 %v1709
        %v1711 = vpop.f32.mrb[0].mxu0
        %v1712 = vadd.f32 %v1461, %v1711
        %v1713 = vpop.f32.mrb[0].mxu0
        %1714 = vmatprep.mubr.f32.mxu0 0.0
        %v1715 = vand.u32 %v1293, 4294901760
        %1716 = vmatmul.mubr.f32.gmra.mrb[0].mxu0 %v1715
        %v1717 = vpop.f32.mrb[0].mxu0
        %v1718 = vadd.f32 %v1471, %v1717
        %v1719 = vpop.f32.mrb[0].mxu0
        %1720 = vmatprep.mubr.f32.mxu0 0.0
        %v1721 = vand.u32 %v1294, 4294901760
        %1722 = vmatmul.mubr.f32.gmra.mrb[0].mxu0 %v1721
        %v1723 = vpop.f32.mrb[0].mxu0
        %v1724 = vadd.f32 %v1481, %v1723
        %v1725 = vpop.f32.mrb[0].mxu0
        %1726 = vmatprep.mubr.f32.mxu0 0.0
        %v1727 = vand.u32 %v1295, 4294901760
        %1728 = vmatmul.mubr.f32.gmra.mrb[0].mxu0 %v1727
        %v1729 = vpop.f32.mrb[0].mxu0
        %v1730 = vadd.f32 %v1491, %v1729
        %v1731 = vpop.f32.mrb[0].mxu0
        %1732 = vmatprep.mubr.f32.mxu0 0.0
        %v1733 = vand.u32 %v1296, 4294901760
        %1734 = vmatmul.mubr.f32.gmra.mrb[0].mxu0 %v1733
        %v1735 = vpop.f32.mrb[0].mxu0
        %v1736 = vadd.f32 %v1501, %v1735
        %v1737 = vpop.f32.mrb[0].mxu0
        %1738 = vmatprep.mubr.f32.mxu0 0.0
        %v1739 = vand.u32 %v1297, 4294901760
        %1740 = vmatmul.mubr.f32.gmra.mrb[0].mxu0 %v1739
        %v1741 = vpop.f32.mrb[0].mxu0
        %v1742 = vadd.f32 %v1511, %v1741
        %v1743 = vpop.f32.mrb[0].mxu0
        %1744 = vmatprep.mubr.f32.mxu0 0.0
        %v1745 = vand.u32 %v1298, 4294901760
        %1746 = vmatmul.mubr.f32.gmra.mrb[0].mxu0 %v1745
        %v1747 = vpop.f32.mrb[0].mxu0
        %v1748 = vadd.f32 %v1521, %v1747
        %v1749 = vpop.f32.mrb[0].mxu0
        %1750 = vmatprep.mubr.f32.mxu0 0.0
        %v1751 = vand.u32 %v1299, 4294901760
        %1752 = vmatmul.mubr.f32.gmra.mrb[0].mxu0 %v1751
        %v1753 = vpop.f32.mrb[0].mxu0
        %v1754 = vadd.f32 %v1531, %v1753
        %v1755 = vpop.f32.mrb[0].mxu0
        %1756 = vdwg.mxu0
        %1757 = vmatprep.subr.mxu0 0.0
        %v1758 = vand.u32 %v1300, 4294901760
        %v1759 = vsub.f32 %v1300, %v1758
        %1760 = vmatpush1.msra.mxu0 %v1759
        %1761 = vmatprep.subr.mxu0 0.0
        %v1762 = vand.u32 %v1301, 4294901760
        %v1763 = vsub.f32 %v1301, %v1762
        %1764 = vmatpush1.msra.mxu0 %v1763
        %1765 = vmatprep.subr.mxu0 0.0
        %v1766 = vand.u32 %v1302, 4294901760
        %v1767 = vsub.f32 %v1302, %v1766
        %1768 = vmatpush1.msra.mxu0 %v1767
        %1769 = vmatprep.subr.mxu0 0.0
        %v1770 = vand.u32 %v1303, 4294901760
        %v1771 = vsub.f32 %v1303, %v1770
        %1772 = vmatpush1.msra.mxu0 %v1771
        %1773 = vmatprep.subr.mxu0 0.0
        %v1774 = vand.u32 %v1304, 4294901760
        %v1775 = vsub.f32 %v1304, %v1774
        %1776 = vmatpush1.msra.mxu0 %v1775
        %1777 = vmatprep.subr.mxu0 0.0
        %v1778 = vand.u32 %v1305, 4294901760
        %v1779 = vsub.f32 %v1305, %v1778
        %1780 = vmatpush1.msra.mxu0 %v1779
        %1781 = vmatprep.subr.mxu0 0.0
        %v1782 = vand.u32 %v1306, 4294901760
        %v1783 = vsub.f32 %v1306, %v1782
        %1784 = vmatpush1.msra.mxu0 %v1783
        %1785 = vmatprep.subr.mxu0 0.0
        %v1786 = vand.u32 %v1307, 4294901760
        %v1787 = vsub.f32 %v1307, %v1786
        %1788 = vmatpush1.msra.mxu0 %v1787
        %1789 = vmatprep.subr.mxu0 0.0
        %v1790 = vand.u32 %v1308, 4294901760
        %v1791 = vsub.f32 %v1308, %v1790
        %1792 = vmatpush1.msra.mxu0 %v1791
        %1793 = vmatprep.subr.mxu0 0.0
        %v1794 = vand.u32 %v1309, 4294901760
        %v1795 = vsub.f32 %v1309, %v1794
        %1796 = vmatpush1.msra.mxu0 %v1795
        %1797 = vmatprep.subr.mxu0 0.0
        %v1798 = vand.u32 %v1310, 4294901760
        %v1799 = vsub.f32 %v1310, %v1798
        %1800 = vmatpush1.msra.mxu0 %v1799
        %1801 = vmatprep.subr.mxu0 0.0
        %v1802 = vand.u32 %v1311, 4294901760
        %v1803 = vsub.f32 %v1311, %v1802
        %1804 = vmatpush1.msra.mxu0 %v1803
        %1805 = vmatprep.subr.mxu0 0.0
        %v1806 = vand.u32 %v1312, 4294901760
        %v1807 = vsub.f32 %v1312, %v1806
        %1808 = vmatpush1.msra.mxu0 %v1807
        %1809 = vmatprep.subr.mxu0 0.0
        %v1810 = vand.u32 %v1313, 4294901760
        %v1811 = vsub.f32 %v1313, %v1810
        %1812 = vmatpush1.msra.mxu0 %v1811
        %1813 = vmatprep.subr.mxu0 0.0
        %v1814 = vand.u32 %v1314, 4294901760
        %v1815 = vsub.f32 %v1314, %v1814
        %1816 = vmatpush1.msra.mxu0 %v1815
        %1817 = vmatprep.subr.mxu0 0.0
        %v1818 = vand.u32 %v1315, 4294901760
        %v1819 = vsub.f32 %v1315, %v1818
        %1820 = vmatpush1.msra.mxu0 %v1819
        %1821 = vmatprep.subr.mxu0 0.0
        %1822 = vmatpush1.msra.mxu0 0.0
        %1823 = vmatprep.subr.mxu0 0.0
        %1824 = vmatpush1.msra.mxu0 0.0
        %1825 = vmatprep.subr.mxu0 0.0
        %1826 = vmatpush1.msra.mxu0 0.0
        %1827 = vmatprep.subr.mxu0 0.0
        %1828 = vmatpush1.msra.mxu0 0.0
        %1829 = vmatprep.subr.mxu0 0.0
        %1830 = vmatpush1.msra.mxu0 0.0
        %1831 = vmatprep.subr.mxu0 0.0
        %1832 = vmatpush1.msra.mxu0 0.0
        %1833 = vmatprep.subr.mxu0 0.0
        %1834 = vmatpush1.msra.mxu0 0.0
        %1835 = vmatprep.subr.mxu0 0.0
        %1836 = vmatpush1.msra.mxu0 0.0
        %1837 = vmatprep.subr.mxu0 0.0
        %1838 = vmatpush1.msra.mxu0 0.0
        %1839 = vmatprep.subr.mxu0 0.0
        %1840 = vmatpush1.msra.mxu0 0.0
        %1841 = vmatprep.subr.mxu0 0.0
        %1842 = vmatpush1.msra.mxu0 0.0
        %1843 = vmatprep.subr.mxu0 0.0
        %1844 = vmatpush1.msra.mxu0 0.0
        %1845 = vmatprep.subr.mxu0 0.0
        %1846 = vmatpush1.msra.mxu0 0.0
        %1847 = vmatprep.subr.mxu0 0.0
        %1848 = vmatpush1.msra.mxu0 0.0
        %1849 = vmatprep.subr.mxu0 0.0
        %1850 = vmatpush1.msra.mxu0 0.0
        %1851 = vmatprep.subr.mxu0 0.0
        %1852 = vmatpush1.msra.mxu0 0.0
        %1853 = vmatprep.mubr.f32.mxu0 0.0
        %v1854 = vand.u32 %v1287, 4294901760
        %v1855 = vsub.f32 %v1287, %v1854
        %1856 = vmatmul.mubr.f32.gmra.mrb[0].mxu0 %v1855
        %v1857 = vpop.f32.mrb[0].mxu0
        %v1858 = vadd.f32 %v1682, %v1857
        %v1859 = vpop.f32.mrb[0].mxu0
        %1860 = vmatprep.mubr.f32.mxu0 0.0
        %v1861 = vand.u32 %v1288, 4294901760
        %v1862 = vsub.f32 %v1288, %v1861
        %1863 = vmatmul.mubr.f32.gmra.mrb[0].mxu0 %v1862
        %v1864 = vpop.f32.mrb[0].mxu0
        %v1865 = vadd.f32 %v1688, %v1864
        %v1866 = vpop.f32.mrb[0].mxu0
        %1867 = vmatprep.mubr.f32.mxu0 0.0
        %v1868 = vand.u32 %v1289, 4294901760
        %v1869 = vsub.f32 %v1289, %v1868
        %1870 = vmatmul.mubr.f32.gmra.mrb[0].mxu0 %v1869
        %v1871 = vpop.f32.mrb[0].mxu0
        %v1872 = vadd.f32 %v1694, %v1871
        %v1873 = vpop.f32.mrb[0].mxu0
        %1874 = vmatprep.mubr.f32.mxu0 0.0
        %v1875 = vand.u32 %v1290, 4294901760
        %v1876 = vsub.f32 %v1290, %v1875
        %1877 = vmatmul.mubr.f32.gmra.mrb[0].mxu0 %v1876
        %v1878 = vpop.f32.mrb[0].mxu0
        %v1879 = vadd.f32 %v1700, %v1878
        %v1880 = vpop.f32.mrb[0].mxu0
        %1881 = vmatprep.mubr.f32.mxu0 0.0
        %v1882 = vand.u32 %v1291, 4294901760
        %v1883 = vsub.f32 %v1291, %v1882
        %1884 = vmatmul.mubr.f32.gmra.mrb[0].mxu0 %v1883
        %v1885 = vpop.f32.mrb[0].mxu0
        %v1886 = vadd.f32 %v1706, %v1885
        %v1887 = vpop.f32.mrb[0].mxu0
        %1888 = vmatprep.mubr.f32.mxu0 0.0
        %v1889 = vand.u32 %v1292, 4294901760
        %v1890 = vsub.f32 %v1292, %v1889
        %1891 = vmatmul.mubr.f32.gmra.mrb[0].mxu0 %v1890
        %v1892 = vpop.f32.mrb[0].mxu0
        %v1893 = vadd.f32 %v1712, %v1892
        %v1894 = vpop.f32.mrb[0].mxu0
        %1895 = vmatprep.mubr.f32.mxu0 0.0
        %v1896 = vand.u32 %v1293, 4294901760
        %v1897 = vsub.f32 %v1293, %v1896
        %1898 = vmatmul.mubr.f32.gmra.mrb[0].mxu0 %v1897
        %v1899 = vpop.f32.mrb[0].mxu0
        %v1900 = vadd.f32 %v1718, %v1899
        %v1901 = vpop.f32.mrb[0].mxu0
        %1902 = vmatprep.mubr.f32.mxu0 0.0
        %v1903 = vand.u32 %v1294, 4294901760
        %v1904 = vsub.f32 %v1294, %v1903
        %1905 = vmatmul.mubr.f32.gmra.mrb[0].mxu0 %v1904
        %v1906 = vpop.f32.mrb[0].mxu0
        %v1907 = vadd.f32 %v1724, %v1906
        %v1908 = vpop.f32.mrb[0].mxu0
        %1909 = vmatprep.mubr.f32.mxu0 0.0
        %v1910 = vand.u32 %v1295, 4294901760
        %v1911 = vsub.f32 %v1295, %v1910
        %1912 = vmatmul.mubr.f32.gmra.mrb[0].mxu0 %v1911
        %v1913 = vpop.f32.mrb[0].mxu0
        %v1914 = vadd.f32 %v1730, %v1913
        %v1915 = vpop.f32.mrb[0].mxu0
        %1916 = vmatprep.mubr.f32.mxu0 0.0
        %v1917 = vand.u32 %v1296, 4294901760
        %v1918 = vsub.f32 %v1296, %v1917
        %1919 = vmatmul.mubr.f32.gmra.mrb[0].mxu0 %v1918
        %v1920 = vpop.f32.mrb[0].mxu0
        %v1921 = vadd.f32 %v1736, %v1920
        %v1922 = vpop.f32.mrb[0].mxu0
        %1923 = vmatprep.mubr.f32.mxu0 0.0
        %v1924 = vand.u32 %v1297, 4294901760
        %v1925 = vsub.f32 %v1297, %v1924
        %1926 = vmatmul.mubr.f32.gmra.mrb[0].mxu0 %v1925
        %v1927 = vpop.f32.mrb[0].mxu0
        %v1928 = vadd.f32 %v1742, %v1927
        %v1929 = vpop.f32.mrb[0].mxu0
        %1930 = vmatprep.mubr.f32.mxu0 0.0
        %v1931 = vand.u32 %v1298, 4294901760
        %v1932 = vsub.f32 %v1298, %v1931
        %1933 = vmatmul.mubr.f32.gmra.mrb[0].mxu0 %v1932
        %v1934 = vpop.f32.mrb[0].mxu0
        %v1935 = vadd.f32 %v1748, %v1934
        %v1936 = vpop.f32.mrb[0].mxu0
        %1937 = vmatprep.mubr.f32.mxu0 0.0
        %v1938 = vand.u32 %v1299, 4294901760
        %v1939 = vsub.f32 %v1299, %v1938
        %1940 = vmatmul.mubr.f32.gmra.mrb[0].mxu0 %v1939
        %v1941 = vpop.f32.mrb[0].mxu0
        %v1942 = vadd.f32 %v1754, %v1941
        %v1943 = vpop.f32.mrb[0].mxu0
        %1944 = vdwg.mxu0
        %1945 = vmatprep.subr.mxu0 0.0
        %v1946 = vand.u32 %v1300, 4294901760
        %1947 = vmatpush1.msra.mxu0 %v1946
        %1948 = vmatprep.subr.mxu0 0.0
        %v1949 = vand.u32 %v1301, 4294901760
        %1950 = vmatpush1.msra.mxu0 %v1949
        %1951 = vmatprep.subr.mxu0 0.0
        %v1952 = vand.u32 %v1302, 4294901760
        %1953 = vmatpush1.msra.mxu0 %v1952
        %1954 = vmatprep.subr.mxu0 0.0
        %v1955 = vand.u32 %v1303, 4294901760
        %1956 = vmatpush1.msra.mxu0 %v1955
        %1957 = vmatprep.subr.mxu0 0.0
        %v1958 = vand.u32 %v1304, 4294901760
        %1959 = vmatpush1.msra.mxu0 %v1958
        %1960 = vmatprep.subr.mxu0 0.0
        %v1961 = vand.u32 %v1305, 4294901760
        %1962 = vmatpush1.msra.mxu0 %v1961
        %1963 = vmatprep.subr.mxu0 0.0
        %v1964 = vand.u32 %v1306, 4294901760
        %1965 = vmatpush1.msra.mxu0 %v1964
        %1966 = vmatprep.subr.mxu0 0.0
        %v1967 = vand.u32 %v1307, 4294901760
        %1968 = vmatpush1.msra.mxu0 %v1967
        %1969 = vmatprep.subr.mxu0 0.0
        %v1970 = vand.u32 %v1308, 4294901760
        %1971 = vmatpush1.msra.mxu0 %v1970
        %1972 = vmatprep.subr.mxu0 0.0
        %v1973 = vand.u32 %v1309, 4294901760
        %1974 = vmatpush1.msra.mxu0 %v1973
        %1975 = vmatprep.subr.mxu0 0.0
        %v1976 = vand.u32 %v1310, 4294901760
        %1977 = vmatpush1.msra.mxu0 %v1976
        %1978 = vmatprep.subr.mxu0 0.0
        %v1979 = vand.u32 %v1311, 4294901760
        %1980 = vmatpush1.msra.mxu0 %v1979
        %1981 = vmatprep.subr.mxu0 0.0
        %v1982 = vand.u32 %v1312, 4294901760
        %1983 = vmatpush1.msra.mxu0 %v1982
        %1984 = vmatprep.subr.mxu0 0.0
        %v1985 = vand.u32 %v1313, 4294901760
        %1986 = vmatpush1.msra.mxu0 %v1985
        %1987 = vmatprep.subr.mxu0 0.0
        %v1988 = vand.u32 %v1314, 4294901760
        %1989 = vmatpush1.msra.mxu0 %v1988
        %1990 = vmatprep.subr.mxu0 0.0
        %v1991 = vand.u32 %v1315, 4294901760
        %1992 = vmatpush1.msra.mxu0 %v1991
        %1993 = vmatprep.subr.mxu0 0.0
        %1994 = vmatpush1.msra.mxu0 0.0
        %1995 = vmatprep.subr.mxu0 0.0
        %1996 = vmatpush1.msra.mxu0 0.0
        %1997 = vmatprep.subr.mxu0 0.0
        %1998 = vmatpush1.msra.mxu0 0.0
        %1999 = vmatprep.subr.mxu0 0.0
        %2000 = vmatpush1.msra.mxu0 0.0
        %2001 = vmatprep.subr.mxu0 0.0
        %2002 = vmatpush1.msra.mxu0 0.0
        %2003 = vmatprep.subr.mxu0 0.0
        %2004 = vmatpush1.msra.mxu0 0.0
        %2005 = vmatprep.subr.mxu0 0.0
        %2006 = vmatpush1.msra.mxu0 0.0
        %2007 = vmatprep.subr.mxu0 0.0
        %2008 = vmatpush1.msra.mxu0 0.0
        %2009 = vmatprep.subr.mxu0 0.0
        %2010 = vmatpush1.msra.mxu0 0.0
        %2011 = vmatprep.subr.mxu0 0.0
        %2012 = vmatpush1.msra.mxu0 0.0
        %2013 = vmatprep.subr.mxu0 0.0
        %2014 = vmatpush1.msra.mxu0 0.0
        %2015 = vmatprep.subr.mxu0 0.0
        %2016 = vmatpush1.msra.mxu0 0.0
        %2017 = vmatprep.subr.mxu0 0.0
        %2018 = vmatpush1.msra.mxu0 0.0
        %2019 = vmatprep.subr.mxu0 0.0
        %2020 = vmatpush1.msra.mxu0 0.0
        %2021 = vmatprep.subr.mxu0 0.0
        %2022 = vmatpush1.msra.mxu0 0.0
        %2023 = vmatprep.subr.mxu0 0.0
        %2024 = vmatpush1.msra.mxu0 0.0
        %2025 = vmatprep.mubr.f32.mxu0 0.0
        %v2026 = vand.u32 %v1287, 4294901760
        %v2027 = vsub.f32 %v1287, %v2026
        %v2028 = vand.u32 %v2027, 4294901760
        %2029 = vmatmul.mubr.f32.gmra.mrb[0].mxu0 %v2028
        %v2030 = vpop.f32.mrb[0].mxu0
        %v2031 = vadd.f32 %v1858, %v2030
        %v2032 = vpop.f32.mrb[0].mxu0
        %2033 = vmatprep.mubr.f32.mxu0 0.0
        %v2034 = vand.u32 %v1288, 4294901760
        %v2035 = vsub.f32 %v1288, %v2034
        %v2036 = vand.u32 %v2035, 4294901760
        %2037 = vmatmul.mubr.f32.gmra.mrb[0].mxu0 %v2036
        %v2038 = vpop.f32.mrb[0].mxu0
        %v2039 = vadd.f32 %v1865, %v2038
        %v2040 = vpop.f32.mrb[0].mxu0
        %2041 = vmatprep.mubr.f32.mxu0 0.0
        %v2042 = vand.u32 %v1289, 4294901760
        %v2043 = vsub.f32 %v1289, %v2042
        %v2044 = vand.u32 %v2043, 4294901760
        %2045 = vmatmul.mubr.f32.gmra.mrb[0].mxu0 %v2044
        %v2046 = vpop.f32.mrb[0].mxu0
        %v2047 = vadd.f32 %v1872, %v2046
        %v2048 = vpop.f32.mrb[0].mxu0
        %2049 = vmatprep.mubr.f32.mxu0 0.0
        %v2050 = vand.u32 %v1290, 4294901760
        %v2051 = vsub.f32 %v1290, %v2050
        %v2052 = vand.u32 %v2051, 4294901760
        %2053 = vmatmul.mubr.f32.gmra.mrb[0].mxu0 %v2052
        %v2054 = vpop.f32.mrb[0].mxu0
        %v2055 = vadd.f32 %v1879, %v2054
        %v2056 = vpop.f32.mrb[0].mxu0
        %2057 = vmatprep.mubr.f32.mxu0 0.0
        %v2058 = vand.u32 %v1291, 4294901760
        %v2059 = vsub.f32 %v1291, %v2058
        %v2060 = vand.u32 %v2059, 4294901760
        %2061 = vmatmul.mubr.f32.gmra.mrb[0].mxu0 %v2060
        %v2062 = vpop.f32.mrb[0].mxu0
        %v2063 = vadd.f32 %v1886, %v2062
        %v2064 = vpop.f32.mrb[0].mxu0
        %2065 = vmatprep.mubr.f32.mxu0 0.0
        %v2066 = vand.u32 %v1292, 4294901760
        %v2067 = vsub.f32 %v1292, %v2066
        %v2068 = vand.u32 %v2067, 4294901760
        %2069 = vmatmul.mubr.f32.gmra.mrb[0].mxu0 %v2068
        %v2070 = vpop.f32.mrb[0].mxu0
        %v2071 = vadd.f32 %v1893, %v2070
        %v2072 = vpop.f32.mrb[0].mxu0
        %2073 = vmatprep.mubr.f32.mxu0 0.0
        %v2074 = vand.u32 %v1293, 4294901760
        %v2075 = vsub.f32 %v1293, %v2074
        %v2076 = vand.u32 %v2075, 4294901760
        %2077 = vmatmul.mubr.f32.gmra.mrb[0].mxu0 %v2076
        %v2078 = vpop.f32.mrb[0].mxu0
        %v2079 = vadd.f32 %v1900, %v2078
        %v2080 = vpop.f32.mrb[0].mxu0
        %2081 = vmatprep.mubr.f32.mxu0 0.0
        %v2082 = vand.u32 %v1294, 4294901760
        %v2083 = vsub.f32 %v1294, %v2082
        %v2084 = vand.u32 %v2083, 4294901760
        %2085 = vmatmul.mubr.f32.gmra.mrb[0].mxu0 %v2084
        %v2086 = vpop.f32.mrb[0].mxu0
        %v2087 = vadd.f32 %v1907, %v2086
        %v2088 = vpop.f32.mrb[0].mxu0
        %2089 = vmatprep.mubr.f32.mxu0 0.0
        %v2090 = vand.u32 %v1295, 4294901760
        %v2091 = vsub.f32 %v1295, %v2090
        %v2092 = vand.u32 %v2091, 4294901760
        %2093 = vmatmul.mubr.f32.gmra.mrb[0].mxu0 %v2092
        %v2094 = vpop.f32.mrb[0].mxu0
        %v2095 = vadd.f32 %v1914, %v2094
        %v2096 = vpop.f32.mrb[0].mxu0
        %2097 = vmatprep.mubr.f32.mxu0 0.0
        %v2098 = vand.u32 %v1296, 4294901760
        %v2099 = vsub.f32 %v1296, %v2098
        %v2100 = vand.u32 %v2099, 4294901760
        %2101 = vmatmul.mubr.f32.gmra.mrb[0].mxu0 %v2100
        %v2102 = vpop.f32.mrb[0].mxu0
        %v2103 = vadd.f32 %v1921, %v2102
        %v2104 = vpop.f32.mrb[0].mxu0
        %2105 = vmatprep.mubr.f32.mxu0 0.0
        %v2106 = vand.u32 %v1297, 4294901760
        %v2107 = vsub.f32 %v1297, %v2106
        %v2108 = vand.u32 %v2107, 4294901760
        %2109 = vmatmul.mubr.f32.gmra.mrb[0].mxu0 %v2108
        %v2110 = vpop.f32.mrb[0].mxu0
        %v2111 = vadd.f32 %v1928, %v2110
        %v2112 = vpop.f32.mrb[0].mxu0
        %2113 = vmatprep.mubr.f32.mxu0 0.0
        %v2114 = vand.u32 %v1298, 4294901760
        %v2115 = vsub.f32 %v1298, %v2114
        %v2116 = vand.u32 %v2115, 4294901760
        %2117 = vmatmul.mubr.f32.gmra.mrb[0].mxu0 %v2116
        %v2118 = vpop.f32.mrb[0].mxu0
        %v2119 = vadd.f32 %v1935, %v2118
        %v2120 = vpop.f32.mrb[0].mxu0
        %2121 = vmatprep.mubr.f32.mxu0 0.0
        %v2122 = vand.u32 %v1299, 4294901760
        %v2123 = vsub.f32 %v1299, %v2122
        %v2124 = vand.u32 %v2123, 4294901760
        %2125 = vmatmul.mubr.f32.gmra.mrb[0].mxu0 %v2124
        %v2126 = vpop.f32.mrb[0].mxu0
        %v2127 = vadd.f32 %v1942, %v2126
        %v2128 = vpop.f32.mrb[0].mxu0
        %2129 = vdwg.mxu0
        %2130 = vmatprep.subr.mxu0 0.0
        %v2131 = vand.u32 %v1300, 4294901760
        %v2132 = vsub.f32 %v1300, %v2131
        %v2133 = vand.u32 %v2132, 4294901760
        %2134 = vmatpush1.msra.mxu0 %v2133
        %2135 = vmatprep.subr.mxu0 0.0
        %v2136 = vand.u32 %v1301, 4294901760
        %v2137 = vsub.f32 %v1301, %v2136
        %v2138 = vand.u32 %v2137, 4294901760
        %2139 = vmatpush1.msra.mxu0 %v2138
        %2140 = vmatprep.subr.mxu0 0.0
        %v2141 = vand.u32 %v1302, 4294901760
        %v2142 = vsub.f32 %v1302, %v2141
        %v2143 = vand.u32 %v2142, 4294901760
        %2144 = vmatpush1.msra.mxu0 %v2143
        %2145 = vmatprep.subr.mxu0 0.0
        %v2146 = vand.u32 %v1303, 4294901760
        %v2147 = vsub.f32 %v1303, %v2146
        %v2148 = vand.u32 %v2147, 4294901760
        %2149 = vmatpush1.msra.mxu0 %v2148
        %2150 = vmatprep.subr.mxu0 0.0
        %v2151 = vand.u32 %v1304, 4294901760
        %v2152 = vsub.f32 %v1304, %v2151
        %v2153 = vand.u32 %v2152, 4294901760
        %2154 = vmatpush1.msra.mxu0 %v2153
        %2155 = vmatprep.subr.mxu0 0.0
        %v2156 = vand.u32 %v1305, 4294901760
        %v2157 = vsub.f32 %v1305, %v2156
        %v2158 = vand.u32 %v2157, 4294901760
        %2159 = vmatpush1.msra.mxu0 %v2158
        %2160 = vmatprep.subr.mxu0 0.0
        %v2161 = vand.u32 %v1306, 4294901760
        %v2162 = vsub.f32 %v1306, %v2161
        %v2163 = vand.u32 %v2162, 4294901760
        %2164 = vmatpush1.msra.mxu0 %v2163
        %2165 = vmatprep.subr.mxu0 0.0
        %v2166 = vand.u32 %v1307, 4294901760
        %v2167 = vsub.f32 %v1307, %v2166
        %v2168 = vand.u32 %v2167, 4294901760
        %2169 = vmatpush1.msra.mxu0 %v2168
        %2170 = vmatprep.subr.mxu0 0.0
        %v2171 = vand.u32 %v1308, 4294901760
        %v2172 = vsub.f32 %v1308, %v2171
        %v2173 = vand.u32 %v2172, 4294901760
        %2174 = vmatpush1.msra.mxu0 %v2173
        %2175 = vmatprep.subr.mxu0 0.0
        %v2176 = vand.u32 %v1309, 4294901760
        %v2177 = vsub.f32 %v1309, %v2176
        %v2178 = vand.u32 %v2177, 4294901760
        %2179 = vmatpush1.msra.mxu0 %v2178
        %2180 = vmatprep.subr.mxu0 0.0
        %v2181 = vand.u32 %v1310, 4294901760
        %v2182 = vsub.f32 %v1310, %v2181
        %v2183 = vand.u32 %v2182, 4294901760
        %2184 = vmatpush1.msra.mxu0 %v2183
        %2185 = vmatprep.subr.mxu0 0.0
        %v2186 = vand.u32 %v1311, 4294901760
        %v2187 = vsub.f32 %v1311, %v2186
        %v2188 = vand.u32 %v2187, 4294901760
        %2189 = vmatpush1.msra.mxu0 %v2188
        %2190 = vmatprep.subr.mxu0 0.0
        %v2191 = vand.u32 %v1312, 4294901760
        %v2192 = vsub.f32 %v1312, %v2191
        %v2193 = vand.u32 %v2192, 4294901760
        %2194 = vmatpush1.msra.mxu0 %v2193
        %2195 = vmatprep.subr.mxu0 0.0
        %v2196 = vand.u32 %v1313, 4294901760
        %v2197 = vsub.f32 %v1313, %v2196
        %v2198 = vand.u32 %v2197, 4294901760
        %2199 = vmatpush1.msra.mxu0 %v2198
        %2200 = vmatprep.subr.mxu0 0.0
        %v2201 = vand.u32 %v1314, 4294901760
        %v2202 = vsub.f32 %v1314, %v2201
        %v2203 = vand.u32 %v2202, 4294901760
        %2204 = vmatpush1.msra.mxu0 %v2203
        %2205 = vmatprep.subr.mxu0 0.0
        %v2206 = vand.u32 %v1315, 4294901760
        %v2207 = vsub.f32 %v1315, %v2206
        %v2208 = vand.u32 %v2207, 4294901760
        %2209 = vmatpush1.msra.mxu0 %v2208
        %2210 = vmatprep.subr.mxu0 0.0
        %2211 = vmatpush1.msra.mxu0 0.0
        %2212 = vmatprep.subr.mxu0 0.0
        %2213 = vmatpush1.msra.mxu0 0.0
        %2214 = vmatprep.subr.mxu0 0.0
        %2215 = vmatpush1.msra.mxu0 0.0
        %2216 = vmatprep.subr.mxu0 0.0
        %2217 = vmatpush1.msra.mxu0 0.0
        %2218 = vmatprep.subr.mxu0 0.0
        %2219 = vmatpush1.msra.mxu0 0.0
        %2220 = vmatprep.subr.mxu0 0.0
        %2221 = vmatpush1.msra.mxu0 0.0
        %2222 = vmatprep.subr.mxu0 0.0
        %2223 = vmatpush1.msra.mxu0 0.0
        %2224 = vmatprep.subr.mxu0 0.0
        %2225 = vmatpush1.msra.mxu0 0.0
        %2226 = vmatprep.subr.mxu0 0.0
        %2227 = vmatpush1.msra.mxu0 0.0
        %2228 = vmatprep.subr.mxu0 0.0
        %2229 = vmatpush1.msra.mxu0 0.0
        %2230 = vmatprep.subr.mxu0 0.0
        %2231 = vmatpush1.msra.mxu0 0.0
        %2232 = vmatprep.subr.mxu0 0.0
        %2233 = vmatpush1.msra.mxu0 0.0
        %2234 = vmatprep.subr.mxu0 0.0
        %2235 = vmatpush1.msra.mxu0 0.0
        %2236 = vmatprep.subr.mxu0 0.0
        %2237 = vmatpush1.msra.mxu0 0.0
        %2238 = vmatprep.subr.mxu0 0.0
        %2239 = vmatpush1.msra.mxu0 0.0
        %2240 = vmatprep.subr.mxu0 0.0
        %2241 = vmatpush1.msra.mxu0 0.0
        %2242 = vmatprep.mubr.f32.mxu0 0.0
        %v2243 = vand.u32 %v1287, 4294901760
        %2244 = vmatmul.mubr.f32.gmra.mrb[0].mxu0 %v2243
        %v2245 = vpop.f32.mrb[0].mxu0
        %v2246 = vadd.f32 %v2031, %v2245
        %v2247 = vpop.f32.mrb[0].mxu0
        %2248 = vmatprep.mubr.f32.mxu0 0.0
        %v2249 = vand.u32 %v1288, 4294901760
        %2250 = vmatmul.mubr.f32.gmra.mrb[0].mxu0 %v2249
        %v2251 = vpop.f32.mrb[0].mxu0
        %v2252 = vadd.f32 %v2039, %v2251
        %v2253 = vpop.f32.mrb[0].mxu0
        %2254 = vmatprep.mubr.f32.mxu0 0.0
        %v2255 = vand.u32 %v1289, 4294901760
        %2256 = vmatmul.mubr.f32.gmra.mrb[0].mxu0 %v2255
        %v2257 = vpop.f32.mrb[0].mxu0
        %v2258 = vadd.f32 %v2047, %v2257
        %v2259 = vpop.f32.mrb[0].mxu0
        %2260 = vmatprep.mubr.f32.mxu0 0.0
        %v2261 = vand.u32 %v1290, 4294901760
        %2262 = vmatmul.mubr.f32.gmra.mrb[0].mxu0 %v2261
        %v2263 = vpop.f32.mrb[0].mxu0
        %v2264 = vadd.f32 %v2055, %v2263
        %v2265 = vpop.f32.mrb[0].mxu0
        %2266 = vmatprep.mubr.f32.mxu0 0.0
        %v2267 = vand.u32 %v1291, 4294901760
        %2268 = vmatmul.mubr.f32.gmra.mrb[0].mxu0 %v2267
        %v2269 = vpop.f32.mrb[0].mxu0
        %v2270 = vadd.f32 %v2063, %v2269
        %v2271 = vpop.f32.mrb[0].mxu0
        %2272 = vmatprep.mubr.f32.mxu0 0.0
        %v2273 = vand.u32 %v1292, 4294901760
        %2274 = vmatmul.mubr.f32.gmra.mrb[0].mxu0 %v2273
        %v2275 = vpop.f32.mrb[0].mxu0
        %v2276 = vadd.f32 %v2071, %v2275
        %v2277 = vpop.f32.mrb[0].mxu0
        %2278 = vmatprep.mubr.f32.mxu0 0.0
        %v2279 = vand.u32 %v1293, 4294901760
        %2280 = vmatmul.mubr.f32.gmra.mrb[0].mxu0 %v2279
        %v2281 = vpop.f32.mrb[0].mxu0
        %v2282 = vadd.f32 %v2079, %v2281
        %v2283 = vpop.f32.mrb[0].mxu0
        %2284 = vmatprep.mubr.f32.mxu0 0.0
        %v2285 = vand.u32 %v1294, 4294901760
        %2286 = vmatmul.mubr.f32.gmra.mrb[0].mxu0 %v2285
        %v2287 = vpop.f32.mrb[0].mxu0
        %v2288 = vadd.f32 %v2087, %v2287
        %v2289 = vpop.f32.mrb[0].mxu0
        %2290 = vmatprep.mubr.f32.mxu0 0.0
        %v2291 = vand.u32 %v1295, 4294901760
        %2292 = vmatmul.mubr.f32.gmra.mrb[0].mxu0 %v2291
        %v2293 = vpop.f32.mrb[0].mxu0
        %v2294 = vadd.f32 %v2095, %v2293
        %v2295 = vpop.f32.mrb[0].mxu0
        %2296 = vmatprep.mubr.f32.mxu0 0.0
        %v2297 = vand.u32 %v1296, 4294901760
        %2298 = vmatmul.mubr.f32.gmra.mrb[0].mxu0 %v2297
        %v2299 = vpop.f32.mrb[0].mxu0
        %v2300 = vadd.f32 %v2103, %v2299
        %v2301 = vpop.f32.mrb[0].mxu0
        %2302 = vmatprep.mubr.f32.mxu0 0.0
        %v2303 = vand.u32 %v1297, 4294901760
        %2304 = vmatmul.mubr.f32.gmra.mrb[0].mxu0 %v2303
        %v2305 = vpop.f32.mrb[0].mxu0
        %v2306 = vadd.f32 %v2111, %v2305
        %v2307 = vpop.f32.mrb[0].mxu0
        %2308 = vmatprep.mubr.f32.mxu0 0.0
        %v2309 = vand.u32 %v1298, 4294901760
        %2310 = vmatmul.mubr.f32.gmra.mrb[0].mxu0 %v2309
        %v2311 = vpop.f32.mrb[0].mxu0
        %v2312 = vadd.f32 %v2119, %v2311
        %v2313 = vpop.f32.mrb[0].mxu0
        %2314 = vmatprep.mubr.f32.mxu0 0.0
        %v2315 = vand.u32 %v1299, 4294901760
        %2316 = vmatmul.mubr.f32.gmra.mrb[0].mxu0 %v2315
        %v2317 = vpop.f32.mrb[0].mxu0
        %v2318 = vadd.f32 %v2127, %v2317
        %v2319 = vpop.f32.mrb[0].mxu0
        %2320 = vdwg.mxu0
        %2321 = vmatprep.subr.mxu0 0.0
        %v2322 = vand.u32 %v1300, 4294901760
        %2323 = vmatpush1.msra.mxu0 %v2322
        %2324 = vmatprep.subr.mxu0 0.0
        %v2325 = vand.u32 %v1301, 4294901760
        %2326 = vmatpush1.msra.mxu0 %v2325
        %2327 = vmatprep.subr.mxu0 0.0
        %v2328 = vand.u32 %v1302, 4294901760
        %2329 = vmatpush1.msra.mxu0 %v2328
        %2330 = vmatprep.subr.mxu0 0.0
        %v2331 = vand.u32 %v1303, 4294901760
        %2332 = vmatpush1.msra.mxu0 %v2331
        %2333 = vmatprep.subr.mxu0 0.0
        %v2334 = vand.u32 %v1304, 4294901760
        %2335 = vmatpush1.msra.mxu0 %v2334
        %2336 = vmatprep.subr.mxu0 0.0
        %v2337 = vand.u32 %v1305, 4294901760
        %2338 = vmatpush1.msra.mxu0 %v2337
        %2339 = vmatprep.subr.mxu0 0.0
        %v2340 = vand.u32 %v1306, 4294901760
        %2341 = vmatpush1.msra.mxu0 %v2340
        %2342 = vmatprep.subr.mxu0 0.0
        %v2343 = vand.u32 %v1307, 4294901760
        %2344 = vmatpush1.msra.mxu0 %v2343
        %2345 = vmatprep.subr.mxu0 0.0
        %v2346 = vand.u32 %v1308, 4294901760
        %2347 = vmatpush1.msra.mxu0 %v2346
        %2348 = vmatprep.subr.mxu0 0.0
        %v2349 = vand.u32 %v1309, 4294901760
        %2350 = vmatpush1.msra.mxu0 %v2349
        %2351 = vmatprep.subr.mxu0 0.0
        %v2352 = vand.u32 %v1310, 4294901760
        %2353 = vmatpush1.msra.mxu0 %v2352
        %2354 = vmatprep.subr.mxu0 0.0
        %v2355 = vand.u32 %v1311, 4294901760
        %2356 = vmatpush1.msra.mxu0 %v2355
        %2357 = vmatprep.subr.mxu0 0.0
        %v2358 = vand.u32 %v1312, 4294901760
        %2359 = vmatpush1.msra.mxu0 %v2358
        %2360 = vmatprep.subr.mxu0 0.0
        %v2361 = vand.u32 %v1313, 4294901760
        %2362 = vmatpush1.msra.mxu0 %v2361
        %2363 = vmatprep.subr.mxu0 0.0
        %v2364 = vand.u32 %v1314, 4294901760
        %2365 = vmatpush1.msra.mxu0 %v2364
        %2366 = vmatprep.subr.mxu0 0.0
        %v2367 = vand.u32 %v1315, 4294901760
        %2368 = vmatpush1.msra.mxu0 %v2367
        %2369 = vmatprep.subr.mxu0 0.0
        %2370 = vmatpush1.msra.mxu0 0.0
        %2371 = vmatprep.subr.mxu0 0.0
        %2372 = vmatpush1.msra.mxu0 0.0
        %2373 = vmatprep.subr.mxu0 0.0
        %2374 = vmatpush1.msra.mxu0 0.0
        %2375 = vmatprep.subr.mxu0 0.0
        %2376 = vmatpush1.msra.mxu0 0.0
        %2377 = vmatprep.subr.mxu0 0.0
        %2378 = vmatpush1.msra.mxu0 0.0
        %2379 = vmatprep.subr.mxu0 0.0
        %2380 = vmatpush1.msra.mxu0 0.0
        %2381 = vmatprep.subr.mxu0 0.0
        %2382 = vmatpush1.msra.mxu0 0.0
        %2383 = vmatprep.subr.mxu0 0.0
        %2384 = vmatpush1.msra.mxu0 0.0
        %2385 = vmatprep.subr.mxu0 0.0
        %2386 = vmatpush1.msra.mxu0 0.0
        %2387 = vmatprep.subr.mxu0 0.0
        %2388 = vmatpush1.msra.mxu0 0.0
        %2389 = vmatprep.subr.mxu0 0.0
        %2390 = vmatpush1.msra.mxu0 0.0
        %2391 = vmatprep.subr.mxu0 0.0
        %2392 = vmatpush1.msra.mxu0 0.0
        %2393 = vmatprep.subr.mxu0 0.0
        %2394 = vmatpush1.msra.mxu0 0.0
        %2395 = vmatprep.subr.mxu0 0.0
        %2396 = vmatpush1.msra.mxu0 0.0
        %2397 = vmatprep.subr.mxu0 0.0
        %2398 = vmatpush1.msra.mxu0 0.0
        %2399 = vmatprep.subr.mxu0 0.0
        %2400 = vmatpush1.msra.mxu0 0.0
        %2401 = vmatprep.mubr.f32.mxu0 0.0
        %v2402 = vand.u32 %v1287, 4294901760
        %2403 = vmatmul.mubr.f32.gmra.mrb[0].mxu0 %v2402
        %v2404 = vpop.f32.mrb[0].mxu0
        %v2405 = vadd.f32 %v2246, %v2404
        %v2406 = vpop.f32.mrb[0].mxu0
        %2407 = vmatprep.mubr.f32.mxu0 0.0
        %v2408 = vand.u32 %v1288, 4294901760
        %2409 = vmatmul.mubr.f32.gmra.mrb[0].mxu0 %v2408
        %v2410 = vpop.f32.mrb[0].mxu0
        %v2411 = vadd.f32 %v2252, %v2410
        %v2412 = vpop.f32.mrb[0].mxu0
        %2413 = vmatprep.mubr.f32.mxu0 0.0
        %v2414 = vand.u32 %v1289, 4294901760
        %2415 = vmatmul.mubr.f32.gmra.mrb[0].mxu0 %v2414
        %v2416 = vpop.f32.mrb[0].mxu0
        %v2417 = vadd.f32 %v2258, %v2416
        %v2418 = vpop.f32.mrb[0].mxu0
        %2419 = vmatprep.mubr.f32.mxu0 0.0
        %v2420 = vand.u32 %v1290, 4294901760
        %2421 = vmatmul.mubr.f32.gmra.mrb[0].mxu0 %v2420
        %v2422 = vpop.f32.mrb[0].mxu0
        %v2423 = vadd.f32 %v2264, %v2422
        %v2424 = vpop.f32.mrb[0].mxu0
        %2425 = vmatprep.mubr.f32.mxu0 0.0
        %v2426 = vand.u32 %v1291, 4294901760
        %2427 = vmatmul.mubr.f32.gmra.mrb[0].mxu0 %v2426
        %v2428 = vpop.f32.mrb[0].mxu0
        %v2429 = vadd.f32 %v2270, %v2428
        %v2430 = vpop.f32.mrb[0].mxu0
        %2431 = vmatprep.mubr.f32.mxu0 0.0
        %v2432 = vand.u32 %v1292, 4294901760
        %2433 = vmatmul.mubr.f32.gmra.mrb[0].mxu0 %v2432
        %v2434 = vpop.f32.mrb[0].mxu0
        %v2435 = vadd.f32 %v2276, %v2434
        %v2436 = vpop.f32.mrb[0].mxu0
        %2437 = vmatprep.mubr.f32.mxu0 0.0
        %v2438 = vand.u32 %v1293, 4294901760
        %2439 = vmatmul.mubr.f32.gmra.mrb[0].mxu0 %v2438
        %v2440 = vpop.f32.mrb[0].mxu0
        %v2441 = vadd.f32 %v2282, %v2440
        %v2442 = vpop.f32.mrb[0].mxu0
        %2443 = vmatprep.mubr.f32.mxu0 0.0
        %v2444 = vand.u32 %v1294, 4294901760
        %2445 = vmatmul.mubr.f32.gmra.mrb[0].mxu0 %v2444
        %v2446 = vpop.f32.mrb[0].mxu0
        %v2447 = vadd.f32 %v2288, %v2446
        %v2448 = vpop.f32.mrb[0].mxu0
        %2449 = vmatprep.mubr.f32.mxu0 0.0
        %v2450 = vand.u32 %v1295, 4294901760
        %2451 = vmatmul.mubr.f32.gmra.mrb[0].mxu0 %v2450
        %v2452 = vpop.f32.mrb[0].mxu0
        %v2453 = vadd.f32 %v2294, %v2452
        %v2454 = vpop.f32.mrb[0].mxu0
        %2455 = vmatprep.mubr.f32.mxu0 0.0
        %v2456 = vand.u32 %v1296, 4294901760
        %2457 = vmatmul.mubr.f32.gmra.mrb[0].mxu0 %v2456
        %v2458 = vpop.f32.mrb[0].mxu0
        %v2459 = vadd.f32 %v2300, %v2458
        %v2460 = vpop.f32.mrb[0].mxu0
        %2461 = vmatprep.mubr.f32.mxu0 0.0
        %v2462 = vand.u32 %v1297, 4294901760
        %2463 = vmatmul.mubr.f32.gmra.mrb[0].mxu0 %v2462
        %v2464 = vpop.f32.mrb[0].mxu0
        %v2465 = vadd.f32 %v2306, %v2464
        %v2466 = vpop.f32.mrb[0].mxu0
        %2467 = vmatprep.mubr.f32.mxu0 0.0
        %v2468 = vand.u32 %v1298, 4294901760
        %2469 = vmatmul.mubr.f32.gmra.mrb[0].mxu0 %v2468
        %v2470 = vpop.f32.mrb[0].mxu0
        %v2471 = vadd.f32 %v2312, %v2470
        %v2472 = vpop.f32.mrb[0].mxu0
        %2473 = vmatprep.mubr.f32.mxu0 0.0
        %v2474 = vand.u32 %v1299, 4294901760
        %2475 = vmatmul.mubr.f32.gmra.mrb[0].mxu0 %v2474
        %v2476 = vpop.f32.mrb[0].mxu0
        %v2477 = vadd.f32 %v2318, %v2476
        %v2478 = vpop.f32.mrb[0].mxu0
        %2479 = vdwg.mxu0
        %2480 = vst.msk [vmem:[%s226] sm:$0xff] %vm268, %v2405
        %2481 = vst.msk [vmem:[%s226 + $0x8] sm:$0xff] %vm268, %v2411
        %2482 = vst.msk [vmem:[%s226 + $0x10] sm:$0xff] %vm268, %v2417
        %2483 = vst.msk [vmem:[%s226 + $0x18] sm:$0xff] %vm268, %v2423
        %2484 = vst.msk [vmem:[%s226 + $0x20] sm:$0xff] %vm268, %v2429
        %2485 = vst.msk [vmem:[%s226 + $0x28] sm:$0xff] %vm268, %v2435
        %2486 = vst.msk [vmem:[%s226 + $0x30] sm:$0xff] %vm268, %v2441
        %2487 = vst.msk [vmem:[%s226 + $0x38] sm:$0xff] %vm268, %v2447
        %2488 = vst.msk [vmem:[%s226 + $0x40] sm:$0xff] %vm268, %v2453
        %2489 = vst.msk [vmem:[%s226 + $0x48] sm:$0xff] %vm268, %v2459
        %2490 = vst.msk [vmem:[%s226 + $0x50] sm:$0xff] %vm268, %v2465
        %2491 = vst.msk [vmem:[%s226 + $0x58] sm:$0xff] %vm268, %v2471
        %2492 = vst.msk [vmem:[%s226 + $0x60] sm:$0xff] %vm268, %v2477
        %s2493 = sand.u32 %s134, 1
        %s2494 = sand.u32 %s134, 1
        %s2495 = smul.addr %s2494, 104
        %s2496 = scalar_lea.vmem [#allocation2], %s2495
        // Predicated region
        $region41: #{tpu_custom_call.1} parent=39 // pred_check
          %p2497 = pneg %p144
        $region42: #{tpu_custom_call.1} parent=39 // pred_check_branch
          %2499 = sbr.rel (%p2497) target = $region44
        $region43: #{tpu_custom_call.1} parent=39 // pred_region
          %s2500 = smul.u32 13, %s16
          %s2501 = ssub.s32 25, %s2500
          %p2502 = scmp.lt.s32.totalorder %s2501, 13
          %s2503 = scalar_select %p2502, %s2501, 13
          %s2504 = smul.u32 128, %s2503
          %p2505 = scmp.ne.s32.totalorder 0, %s2504
          %s2506 = smul.addr %s2500, 8
          %s2507 = scalar_lea.vmem %s5, %s2506
          // Predicated region
          $region45: #{tpu_custom_call.1} parent=43 // pred_check
            %p2508 = pneg %p2505
          $region46: #{tpu_custom_call.1} parent=43 // pred_check_branch
            %2510 = sbr.rel (%p2508) target = $region48
          $region47: #{tpu_custom_call.1} parent=43 // pred_region
            // Predicated region
            $region49: #{tpu_custom_call.1} parent=47 // pred_check
              _
            $region50: #{tpu_custom_call.1} parent=47 // pred_check_branch
              %2512 = sbr.rel (0) target = $region52
            $region51: #{tpu_custom_call.1} parent=47 // pred_region
              // Predicated region
              $region71: #{tpu_custom_call.1} parent=51 // pred_check
                _
              $region72: #{tpu_custom_call.1} parent=51 // pred_check_branch
                %2586 = sbr.rel (0) target = $region74
              $region73: #{tpu_custom_call.1} parent=51 // pred_region
                %s2587 = sdiv.u32.pop %s2503, 13
                %s2588 = srem.u32.pop %s2503, 13
                // While loop
                $region75: #{tpu_custom_call.1} parent=73 // loop_pre_header
                  _
                $region76: #{tpu_custom_call.1} parent=73 // loop_header
                  %s2590 = sphi 0, %s2592
                  %p2591 = scmp.ge.s32.totalorder %s2590, %s2587
                  %s2595 = sphi 0, %s2626
                  %s2596 = sphi %s2496, %s2629
                  %s2597 = sphi %s2507, %s2630
                $region77: #{tpu_custom_call.1} parent=73 // loop_header_branch
                  %2594 = sbr.rel (%p2591) target = $region81
                $region78: #{tpu_custom_call.1} parent=73 // loop_body
                  %v2598 = vld [vmem:[%s2596] sm:$0xff]
                  %2599 = vst [vmem:[%s2597] sm:$0xff] %v2598
                  %v2600 = vld [vmem:[%s2596 + $0x8] sm:$0xff]
                  %2601 = vst [vmem:[%s2597 + $0x8] sm:$0xff] %v2600
                  %v2602 = vld [vmem:[%s2596 + $0x10] sm:$0xff]
                  %2603 = vst [vmem:[%s2597 + $0x10] sm:$0xff] %v2602
                  %v2604 = vld [vmem:[%s2596 + $0x18] sm:$0xff]
                  %2605 = vst [vmem:[%s2597 + $0x18] sm:$0xff] %v2604
                  %v2606 = vld [vmem:[%s2596 + $0x20] sm:$0xff]
                  %2607 = vst [vmem:[%s2597 + $0x20] sm:$0xff] %v2606
                  %v2608 = vld [vmem:[%s2596 + $0x28] sm:$0xff]
                  %2609 = vst [vmem:[%s2597 + $0x28] sm:$0xff] %v2608
                  %v2610 = vld [vmem:[%s2596 + $0x30] sm:$0xff]
                  %2611 = vst [vmem:[%s2597 + $0x30] sm:$0xff] %v2610
                  %v2612 = vld [vmem:[%s2596 + $0x38] sm:$0xff]
                  %2613 = vst [vmem:[%s2597 + $0x38] sm:$0xff] %v2612
                  %v2614 = vld [vmem:[%s2596 + $0x40] sm:$0xff]
                  %2615 = vst [vmem:[%s2597 + $0x40] sm:$0xff] %v2614
                  %v2616 = vld [vmem:[%s2596 + $0x48] sm:$0xff]
                  %2617 = vst [vmem:[%s2597 + $0x48] sm:$0xff] %v2616
                  %v2618 = vld [vmem:[%s2596 + $0x50] sm:$0xff]
                  %2619 = vst [vmem:[%s2597 + $0x50] sm:$0xff] %v2618
                  %v2620 = vld [vmem:[%s2596 + $0x58] sm:$0xff]
                  %2621 = vst [vmem:[%s2597 + $0x58] sm:$0xff] %v2620
                  %v2622 = vld [vmem:[%s2596 + $0x60] sm:$0xff]
                  %2623 = vst [vmem:[%s2597 + $0x60] sm:$0xff] %v2622
                  %s2624 = sadd.s32 1, %s2595
                  %p2625 = scmp.ge.s32.totalorder %s2624, %s2587
                  %s2626 = scalar_select %p2625, 0, %s2624
                  %s2627 = smul.u32 %s2626, 104
                  %s2628 = smul.u32 %s2626, 104
                  %s2629 = scalar_lea.vmem %s2496, %s2627 [#allocation2]
                  %s2630 = scalar_lea.vmem %s2507, %s2628
                $region79: #{tpu_custom_call.1} parent=73 // loop_footer
                  %s2592 = sadd.s32 %s2590, 1
                $region80: #{tpu_custom_call.1} parent=73 // loop_footer_branch
                  %2589 = sbr.rel target = $region76
                $region81: #{tpu_custom_call.1} parent=73 // loop_exit
                  _
                %s2631 = sdiv.u32.pop %s2503, 13
                %s2632 = srem.u32.pop %s2503, 13
                %s2633 = smul.u32 %s2631, 13
                %s2634 = smul.u32 8, %s2633
                %s2635 = scalar_lea.vmem %s2496, %s2634 [#allocation2]
                %s2636 = smul.u32 8, %s2633
                %s2637 = scalar_lea.vmem %s2507, %s2636
                // While loop
                $region82: #{tpu_custom_call.1} parent=73 // loop_pre_header
                  _
                $region83: #{tpu_custom_call.1} parent=73 // loop_header
                  %s2639 = sphi 0, %s2641
                  %p2640 = scmp.ge.s32.totalorder %s2639, %s2632
                  %s2644 = sphi 0, %s2651
                  %s2645 = sphi %s2635, %s2654
                  %s2646 = sphi %s2637, %s2655
                $region84: #{tpu_custom_call.1} parent=73 // loop_header_branch
                  %2643 = sbr.rel (%p2640) target = $region88
                $region85: #{tpu_custom_call.1} parent=73 // loop_body
                  %v2647 = vld [vmem:[%s2645] sm:$0xff]
                  %2648 = vst [vmem:[%s2646] sm:$0xff] %v2647
                  %s2649 = sadd.s32 1, %s2644
                  %p2650 = scmp.ge.s32.totalorder %s2649, %s2632
                  %s2651 = scalar_select %p2650, 0, %s2649
                  %s2652 = smul.u32 %s2651, 8
                  %s2653 = smul.u32 %s2651, 8
                  %s2654 = scalar_lea.vmem %s2635, %s2652 [#allocation2]
                  %s2655 = scalar_lea.vmem %s2637, %s2653
                $region86: #{tpu_custom_call.1} parent=73 // loop_footer
                  %s2641 = sadd.s32 %s2639, 1
                $region87: #{tpu_custom_call.1} parent=73 // loop_footer_branch
                  %2638 = sbr.rel target = $region83
                $region88: #{tpu_custom_call.1} parent=73 // loop_exit
                  _
              $region74: #{tpu_custom_call.1} parent=51 // pred_fallthru
                _
              // Predicated region
              $region89: #{tpu_custom_call.1} parent=51 // pred_check
                _
              $region90: #{tpu_custom_call.1} parent=51 // pred_check_branch
                %2657 = sbr.rel target = $region92
              $region91: #{tpu_custom_call.1} parent=51 // pred_region
                _
              $region92: #{tpu_custom_call.1} parent=51 // pred_fallthru
                _
            $region52: #{tpu_custom_call.1} parent=47 // pred_fallthru
              _
            // Predicated region
            $region53: #{tpu_custom_call.1} parent=47 // pred_check
              _
            $region54: #{tpu_custom_call.1} parent=47 // pred_check_branch
              %2514 = sbr.rel target = $region56
            $region55: #{tpu_custom_call.1} parent=47 // pred_region
              %s2516 = sdiv.u32.pop %s2503, 13
              %s2517 = srem.u32.pop %s2503, 13
              // While loop
              $region57: #{tpu_custom_call.1} parent=55 // loop_pre_header
                _
              $region58: #{tpu_custom_call.1} parent=55 // loop_header
                %s2519 = sphi 0, %s2521
                %p2520 = scmp.ge.s32.totalorder %s2519, %s2516
                %s2524 = sphi 0, %s2555
                %s2525 = sphi %s2496, %s2558
                %s2526 = sphi %s2507, %s2559
              $region59: #{tpu_custom_call.1} parent=55 // loop_header_branch
                %2523 = sbr.rel (%p2520) target = $region63
              $region60: #{tpu_custom_call.1} parent=55 // loop_body
                %v2527 = vld [vmem:[%s2525] sm:$0xff]
                %2528 = vst [vmem:[%s2526] sm:$0xff] %v2527
                %v2529 = vld [vmem:[%s2525 + $0x8] sm:$0xff]
                %2530 = vst [vmem:[%s2526 + $0x8] sm:$0xff] %v2529
                %v2531 = vld [vmem:[%s2525 + $0x10] sm:$0xff]
                %2532 = vst [vmem:[%s2526 + $0x10] sm:$0xff] %v2531
                %v2533 = vld [vmem:[%s2525 + $0x18] sm:$0xff]
                %2534 = vst [vmem:[%s2526 + $0x18] sm:$0xff] %v2533
                %v2535 = vld [vmem:[%s2525 + $0x20] sm:$0xff]
                %2536 = vst [vmem:[%s2526 + $0x20] sm:$0xff] %v2535
                %v2537 = vld [vmem:[%s2525 + $0x28] sm:$0xff]
                %2538 = vst [vmem:[%s2526 + $0x28] sm:$0xff] %v2537
                %v2539 = vld [vmem:[%s2525 + $0x30] sm:$0xff]
                %2540 = vst [vmem:[%s2526 + $0x30] sm:$0xff] %v2539
                %v2541 = vld [vmem:[%s2525 + $0x38] sm:$0xff]
                %2542 = vst [vmem:[%s2526 + $0x38] sm:$0xff] %v2541
                %v2543 = vld [vmem:[%s2525 + $0x40] sm:$0xff]
                %2544 = vst [vmem:[%s2526 + $0x40] sm:$0xff] %v2543
                %v2545 = vld [vmem:[%s2525 + $0x48] sm:$0xff]
                %2546 = vst [vmem:[%s2526 + $0x48] sm:$0xff] %v2545
                %v2547 = vld [vmem:[%s2525 + $0x50] sm:$0xff]
                %2548 = vst [vmem:[%s2526 + $0x50] sm:$0xff] %v2547
                %v2549 = vld [vmem:[%s2525 + $0x58] sm:$0xff]
                %2550 = vst [vmem:[%s2526 + $0x58] sm:$0xff] %v2549
                %v2551 = vld [vmem:[%s2525 + $0x60] sm:$0xff]
                %2552 = vst [vmem:[%s2526 + $0x60] sm:$0xff] %v2551
                %s2553 = sadd.s32 1, %s2524
                %p2554 = scmp.ge.s32.totalorder %s2553, %s2516
                %s2555 = scalar_select %p2554, 0, %s2553
                %s2556 = smul.u32 %s2555, 104
                %s2557 = smul.u32 %s2555, 104
                %s2558 = scalar_lea.vmem %s2496, %s2556 [#allocation2]
                %s2559 = scalar_lea.vmem %s2507, %s2557
              $region61: #{tpu_custom_call.1} parent=55 // loop_footer
                %s2521 = sadd.s32 %s2519, 1
              $region62: #{tpu_custom_call.1} parent=55 // loop_footer_branch
                %2518 = sbr.rel target = $region58
              $region63: #{tpu_custom_call.1} parent=55 // loop_exit
                _
              %s2560 = sdiv.u32.pop %s2503, 13
              %s2561 = srem.u32.pop %s2503, 13
              %s2562 = smul.u32 %s2560, 13
              %s2563 = smul.u32 8, %s2562
              %s2564 = scalar_lea.vmem %s2496, %s2563 [#allocation2]
              %s2565 = smul.u32 8, %s2562
              %s2566 = scalar_lea.vmem %s2507, %s2565
              // While loop
              $region64: #{tpu_custom_call.1} parent=55 // loop_pre_header
                _
              $region65: #{tpu_custom_call.1} parent=55 // loop_header
                %s2568 = sphi 0, %s2570
                %p2569 = scmp.ge.s32.totalorder %s2568, %s2561
                %s2573 = sphi 0, %s2580
                %s2574 = sphi %s2564, %s2583
                %s2575 = sphi %s2566, %s2584
              $region66: #{tpu_custom_call.1} parent=55 // loop_header_branch
                %2572 = sbr.rel (%p2569) target = $region70
              $region67: #{tpu_custom_call.1} parent=55 // loop_body
                %v2576 = vld [vmem:[%s2574] sm:$0xff]
                %2577 = vst [vmem:[%s2575] sm:$0xff] %v2576
                %s2578 = sadd.s32 1, %s2573
                %p2579 = scmp.ge.s32.totalorder %s2578, %s2561
                %s2580 = scalar_select %p2579, 0, %s2578
                %s2581 = smul.u32 %s2580, 8
                %s2582 = smul.u32 %s2580, 8
                %s2583 = scalar_lea.vmem %s2564, %s2581 [#allocation2]
                %s2584 = scalar_lea.vmem %s2566, %s2582
              $region68: #{tpu_custom_call.1} parent=55 // loop_footer
                %s2570 = sadd.s32 %s2568, 1
              $region69: #{tpu_custom_call.1} parent=55 // loop_footer_branch
                %2567 = sbr.rel target = $region65
              $region70: #{tpu_custom_call.1} parent=55 // loop_exit
                _
            $region56: #{tpu_custom_call.1} parent=47 // pred_fallthru
              _
          $region48: #{tpu_custom_call.1} parent=43 // pred_fallthru
            _
          %2658 = vnop
        $region44: #{tpu_custom_call.1} parent=39 // pred_fallthru
          _
      $region40: #{tpu_custom_call.1} parent=5 // pred_fallthru
        _
      %p2659 = scmp.le.s32.totalorder 2, %s11
      // Predicated region
      $region93: #{tpu_custom_call.1} parent=5 // pred_check
        %p2660 = pneg %p2659
      $region94: #{tpu_custom_call.1} parent=5 // pred_check_branch
        %2662 = sbr.rel (%p2660) target = $region96
      $region95: #{tpu_custom_call.1} parent=5 // pred_region
        %s2663 = ssub.s32 %s11, 2
        // Predicated region
        $region97: #{tpu_custom_call.1} parent=95 // pred_check
          %p2664 = pneg %p150
        $region98: #{tpu_custom_call.1} parent=95 // pred_check_branch
          %2666 = sbr.rel (%p2664) target = $region100
        $region99: #{tpu_custom_call.1} parent=95 // pred_region
          %s2667 = sand.u32 %s135, 1
          %s2668 = sand.u32 %s135, 1
          %s2669 = smul.addr %s2668, 104
          %s2670 = scalar_lea.vmem [#allocation2], %s2669
        $region100: #{tpu_custom_call.1} parent=95 // pred_fallthru
          _
      $region96: #{tpu_custom_call.1} parent=5 // pred_fallthru
        _
    $region6: #{tpu_custom_call.1} parent=1 // loop_footer
      %s15 = sadd.s32 1, %s11
    $region7: #{tpu_custom_call.1} parent=1 // loop_footer_branch
      %10 = sbr.rel target = $region3
    $region8: #{tpu_custom_call.1} parent=1 // loop_exit
      _

</llo_original>
